<compile_context>
chip_gen: v5e
topology: v5e:2x2
jax: 0.10.0
libtpu: 0.0.40
codegen_flags: <defaults>
</compile_context>

<pallas_src>
import functools
import inspect
import math

import jax
import jax.numpy as jnp
from jax import lax
from jax.experimental import pallas as pl
from jax.experimental.pallas import tpu as pltpu


# --------------------------------------------------------------------------
# Capability / hardware probes (explicit checks; no control-flow try/except)
# --------------------------------------------------------------------------
_HAS_SINGLE_BUFFER = (
    hasattr(pl, "Buffered")
    and "pipeline_mode" in inspect.signature(pl.BlockSpec).parameters
)

_DEFAULT_VMEM_CAP = 128 * 1024 * 1024


@functools.lru_cache(maxsize=1)
def _vmem_capacity_bytes():
    """Physical per-core VMEM. Informational probe only (safe constant fallback)."""
    get_info = getattr(pltpu, "get_tpu_info", None)
    if get_info is None:
        return _DEFAULT_VMEM_CAP
    try:
        cap = getattr(get_info(), "vmem_capacity_bytes", None)
        return int(cap) if cap else _DEFAULT_VMEM_CAP
    except Exception:  # benign info probe; never masks kernel build/run errors
        return _DEFAULT_VMEM_CAP


def _largest_divisor_leq(n, cap):
    d = max(1, min(n, cap))
    while n % d:
        d -= 1
    return d


# --------------------------------------------------------------------------
# Kernel
# --------------------------------------------------------------------------
def _encoder_layer_kernel(x_ref, *refs, num_heads, block_q, block_k, has_mask):
    if has_mask:
        mask_ref, refs = refs[0], refs[1:]
    else:
        mask_ref = None
    (wq_ref, bq_ref, wk_ref, bk_ref, wv_ref, bv_ref, wo_ref, bo_ref,
     g1_ref, be1_ref, w1_ref, b1_ref, w2_ref, b2_ref, g2_ref, be2_ref,
     out_ref, k_heads, v_heads) = refs

    S, D = x_ref.shape[1], x_ref.shape[2]
    H = num_heads
    dh = D // H
    n_kv = S // block_k
    cdtype = wq_ref.dtype                      # MXU operand dtype (f32 or bf16)
    scale = 1.0 / math.sqrt(dh)
    f32 = jnp.float32

    # ---- once per sequence: chunked K/V projection, cached head-major ----
    @pl.when(pl.program_id(1) == 0)
    def _():
        def proj_chunk(c, carry):
            c0 = pl.multiple_of(c * block_q, block_q)
            xc = x_ref[0, pl.ds(c0, block_q), :].astype(cdtype)
            kc = (jnp.dot(xc, wk_ref[...], preferred_element_type=f32)
                  + bk_ref[...].astype(f32))
            vc = (jnp.dot(xc, wv_ref[...], preferred_element_type=f32)
                  + bv_ref[...].astype(f32))
            # value-level head split: (Tq, D) -> (H, Tq, dh); one store per chunk
            k_heads[:, pl.ds(c0, block_q), :] = jnp.transpose(
                kc.reshape(block_q, H, dh), (1, 0, 2)).astype(k_heads.dtype)
            v_heads[:, pl.ds(c0, block_q), :] = jnp.transpose(
                vc.reshape(block_q, H, dh), (1, 0, 2)).astype(v_heads.dtype)
            return carry

        lax.fori_loop(0, S // block_q, proj_chunk, 0)

    # ---- per row block ----
    i = pl.program_id(1)
    row0 = pl.multiple_of(i * block_q, block_q)
    x_tile = x_ref[0, pl.ds(row0, block_q), :]                        # (Tq, D)

    # Q projection: one big MXU matmul; 1/sqrt(dh) folded into Q.
    q = (jnp.dot(x_tile.astype(cdtype), wq_ref[...], preferred_element_type=f32)
         + bq_ref[...].astype(f32)) * scale                           # (Tq, D) f32
    q_hm = jnp.transpose(q.reshape(block_q, H, dh), (1, 0, 2)).astype(cdtype)

    if has_mask:
        mask_tile = mask_ref[0, 0].astype(f32)                        # (Tq, S)

    # ---- KV-chunked online softmax (live footprint independent of S) ----
    m_i = jnp.full((H, block_q, 1), -jnp.inf, f32)
    l_i = jnp.zeros((H, block_q, 1), f32)
    acc = jnp.zeros((H, block_q, dh), f32)
    for c in range(n_kv):                       # static unroll (n_kv compile-time)
        k0 = c * block_k
        kc = k_heads[:, k0:k0 + block_k, :]
        vc = v_heads[:, k0:k0 + block_k, :]
        s = jnp.einsum("hqd,hkd->hqk", q_hm, kc, preferred_element_type=f32)
        if has_mask:
            s = s + mask_tile[:, k0:k0 + block_k][None, :, :]         # additive mask
        m_new = jnp.maximum(m_i, jnp.max(s, axis=-1, keepdims=True))
        alpha = jnp.exp(m_i - m_new)
        p = jnp.exp(s - m_new)
        l_i = alpha * l_i + jnp.sum(p, axis=-1, keepdims=True)
        acc = alpha * acc + jnp.einsum("hqk,hkd->hqd", p.astype(cdtype), vc,
                                       preferred_element_type=f32)
        m_i = m_new

    # NOTE: rows fully masked with -inf produce NaN (matches torch softmax).
    attn_h = acc / l_i                                                 # exact divide
    attn = jnp.transpose(attn_h, (1, 0, 2)).reshape(block_q, D)        # head merge
    attn = (jnp.dot(attn.astype(cdtype), wo_ref[...], preferred_element_type=f32)
            + bo_ref[...].astype(f32))

    # ---- Add & LayerNorm 1 (f32 statistics) ----
    y = x_tile.astype(f32) + attn
    mu = jnp.mean(y, axis=-1, keepdims=True)
    var = jnp.mean((y - mu) * (y - mu), axis=-1, keepdims=True)
    y = (y - mu) * lax.rsqrt(var + 1e-5) * g1_ref[...].astype(f32) \
        + be1_ref[...].astype(f32)

    # ---- Feed-forward (ReLU) ----
    h1 = (jnp.dot(y.astype(cdtype), w1_ref[...], preferred_element_type=f32)
          + b1_ref[...].astype(f32))
    h1 = jnp.maximum(h1, 0.0)
    ff = (jnp.dot(h1.astype(cdtype), w2_ref[...], preferred_element_type=f32)
          + b2_ref[...].astype(f32))

    # ---- Add & LayerNorm 2 (f32 statistics) ----
    z = y + ff
    mu2 = jnp.mean(z, axis=-1, keepdims=True)
    var2 = jnp.mean((z - mu2) * (z - mu2), axis=-1, keepdims=True)
    z = (z - mu2) * lax.rsqrt(var2 + 1e-5) * g2_ref[...].astype(f32) \
        + be2_ref[...].astype(f32)

    out_ref[0] = z.astype(out_ref.dtype)


# --------------------------------------------------------------------------
# pallas_call builder / wrappers
# --------------------------------------------------------------------------
@functools.lru_cache(maxsize=None)
def _build_call(B, S, D, Dff, num_heads, block_q, block_k,
                io_dtype, compute_dtype, has_mask, vmem_limit):
    nq = S // block_q
    dh = D // num_heads

    def wspec(shape):
        # Constant block index: the weight is revisited every grid step, so a
        # single buffer suffices (halves resident-weight VMEM).
        if _HAS_SINGLE_BUFFER:
            return pl.BlockSpec(shape, lambda b, i: (0, 0),
                                pipeline_mode=pl.Buffered(1))
        return pl.BlockSpec(shape, lambda b, i: (0, 0))

    in_specs = [pl.BlockSpec((1, S, D), lambda b, i: (b, 0, 0))]   # x resident / batch
    if has_mask:
        in_specs.append(pl.BlockSpec((1, 1, block_q, S), lambda b, i: (b, 0, i, 0)))
    in_specs += [
        wspec((D, D)), wspec((1, D)),       # wq, bq
        wspec((D, D)), wspec((1, D)),       # wk, bk
        wspec((D, D)), wspec((1, D)),       # wv, bv
        wspec((D, D)), wspec((1, D)),       # wo, bo
        wspec((1, D)), wspec((1, D)),       # ln1 gamma, beta
        wspec((D, Dff)), wspec((1, Dff)),   # w1, b1
        wspec((Dff, D)), wspec((1, D)),     # w2, b2
        wspec((1, D)), wspec((1, D)),       # ln2 gamma, beta
    ]

    kernel = functools.partial(_encoder_layer_kernel, num_heads=num_heads,
                               block_q=block_q, block_k=block_k, has_mask=has_mask)

    # Advisory cost estimate so XLA can overlap/prefetch across per-layer calls.
    w_bytes = jnp.dtype(compute_dtype).itemsize
    x_bytes = jnp.dtype(io_dtype).itemsize
    flops = (2 * B * S * D * D * 4              # Q/K/V/O projections
             + 2 * 2 * B * S * S * D            # QK^T + PV
             + 2 * 2 * B * S * D * Dff)         # FFN
    bytes_accessed = (2 * B * S * D * x_bytes
                      + (4 * D * D + 2 * D * Dff) * w_bytes
                      + (8 * D + 2 * Dff) * 4)
    if has_mask:
        bytes_accessed += B * S * S * 4
    cost = pl.CostEstimate(flops=int(flops),
                           transcendentals=int(B * num_heads * S * S),
                           bytes_accessed=int(bytes_accessed))

    return pl.pallas_call(
        kernel,
        out_shape=jax.ShapeDtypeStruct((B, S, D), io_dtype),
        grid_spec=pltpu.PrefetchScalarGridSpec(
            num_scalar_prefetch=0,
            grid=(B, nq),
            in_specs=in_specs,
            out_specs=pl.BlockSpec((1, block_q, D), lambda b, i: (b, i, 0)),
            scratch_shapes=[
                pltpu.VMEM((num_heads, S, dh), compute_dtype),   # K cache, head-major
                pltpu.VMEM((num_heads, S, dh), compute_dtype),   # V cache, head-major
            ],
        ),
        compiler_params=pltpu.CompilerParams(
            # batch axis can be sharded across TensorCores; seq-tile axis reuses
            # the per-batch K/V scratch filled at tile 0, so it stays in order.
            dimension_semantics=("parallel", "arbitrary"),
            vmem_limit_bytes=int(vmem_limit),
        ),
        cost_estimate=cost,
    )


def encoder_layer_pallas(x, mask, params, *, num_heads, block_q=None,
                         block_k=None, compute_dtype=None):
    B, S, D = x.shape
    Dff = params["w1"].shape[1]
    assert D % num_heads == 0

    compute_dtype = jnp.dtype(compute_dtype if compute_dtype is not None else x.dtype)

    cap = _vmem_capacity_bytes()
    vmem_limit = min(cap - cap // 8, 112 * 1024 * 1024)   # ~56 MiB v7x, 112 MiB v5e/v6e
    q_cap = 256 if cap > 96 * 1024 * 1024 else 128        # generation-aware tile cap
    if block_q is None:
        block_q = _largest_divisor_leq(S, q_cap)
    if block_k is None:
        block_k = _largest_divisor_leq(S, 512)
    assert S % block_q == 0 and S % block_k == 0

    has_mask = mask is not None
    # Matmul weights in the compute dtype (host-side cast halves weight HBM/VMEM
    # when compute_dtype=bf16); biases / LayerNorm params keep their precision.
    wm = {k: params[k].astype(compute_dtype)
          for k in ("wq", "wk", "wv", "wo", "w1", "w2")}
    args = [x] + ([mask] if has_mask else []) + [
        wm["wq"], params["bq"], wm["wk"], params["bk"], wm["wv"], params["bv"],
        wm["wo"], params["bo"], params["ln1_g"], params["ln1_b"],
        wm["w1"], params["b1"], wm["w2"], params["b2"],
        params["ln2_g"], params["ln2_b"],
    ]
    call = _build_call(B, S, D, Dff, num_heads, block_q, block_k,
                       jnp.dtype(x.dtype), compute_dtype, has_mask, int(vmem_limit))
    return call(*args)


def transformer_encoder_pallas(x, mask, layer_params_list, *, num_heads,
                               block_q=None, block_k=None, compute_dtype=None):
    """Equivalent of TransformerEncoder.forward: apply each layer in sequence."""
    for params in layer_params_list:
        x = encoder_layer_pallas(x, mask, params, num_heads=num_heads,
                                 block_q=block_q, block_k=block_k,
                                 compute_dtype=compute_dtype)
    return x


# --------------------------------------------------------------------------
# Params + pure-JAX reference (for a self-check)
# --------------------------------------------------------------------------
def init_layer_params(key, d_model, d_ff):
    ks = jax.random.split(key, 6)
    std = 0.02
    return {
        "wq": jax.random.normal(ks[0], (d_model, d_model), jnp.float32) * std,
        "bq": jnp.zeros((1, d_model), jnp.float32),
        "wk": jax.random.normal(ks[1], (d_model, d_model), jnp.float32) * std,
        "bk": jnp.zeros((1, d_model), jnp.float32),
        "wv": jax.random.normal(ks[2], (d_model, d_model), jnp.float32) * std,
        "bv": jnp.zeros((1, d_model), jnp.float32),
        "wo": jax.random.normal(ks[3], (d_model, d_model), jnp.float32) * std,
        "bo": jnp.zeros((1, d_model), jnp.float32),
        "ln1_g": jnp.ones((1, d_model), jnp.float32),
        "ln1_b": jnp.zeros((1, d_model), jnp.float32),
        "w1": jax.random.normal(ks[4], (d_model, d_ff), jnp.float32) * std,
        "b1": jnp.zeros((1, d_ff), jnp.float32),
        "w2": jax.random.normal(ks[5], (d_ff, d_model), jnp.float32) * std,
        "b2": jnp.zeros((1, d_model), jnp.float32),
        "ln2_g": jnp.ones((1, d_model), jnp.float32),
        "ln2_b": jnp.zeros((1, d_model), jnp.float32),
    }


def _encoder_layer_ref(x, mask, p, *, num_heads):
    B, S, D = x.shape
    dh = D // num_heads
    f32 = lambda t: t.astype(jnp.float32)
    hi = lax.Precision.HIGHEST
    xf = f32(x)

    def proj(t, w, b):
        return jnp.einsum("bsd,de->bse", t, f32(w), precision=hi) + f32(b)

    q = proj(xf, p["wq"], p["bq"]) / math.sqrt(dh)
    k = proj(xf, p["wk"], p["bk"])
    v = proj(xf, p["wv"], p["bv"])
    q = q.reshape(B, S, num_heads, dh).transpose(0, 2, 1, 3)
    k = k.reshape(B, S, num_heads, dh).transpose(0, 2, 1, 3)
    v = v.reshape(B, S, num_heads, dh).transpose(0, 2, 1, 3)
    s = jnp.einsum("bhqd,bhkd->bhqk", q, k, precision=hi)
    if mask is not None:
        s = s + f32(mask)
    a = jnp.einsum("bhqk,bhkd->bhqd", jax.nn.softmax(s, axis=-1), v, precision=hi)
    a = a.transpose(0, 2, 1, 3).reshape(B, S, D)
    a = jnp.einsum("bsd,de->bse", a, f32(p["wo"]), precision=hi) + f32(p["bo"])

    def ln(t, g, b):
        mu = t.mean(-1, keepdims=True)
        var = ((t - mu) ** 2).mean(-1, keepdims=True)
        return (t - mu) * lax.rsqrt(var + 1e-5) * f32(g) + f32(b)

    y = ln(xf + a, p["ln1_g"], p["ln1_b"])
    h = jnp.maximum(jnp.einsum("bsd,df->bsf", y, f32(p["w1"]), precision=hi)
                    + f32(p["b1"]), 0.0)
    ff = jnp.einsum("bsf,fd->bsd", h, f32(p["w2"]), precision=hi) + f32(p["b2"])
    return ln(y + ff, p["ln2_g"], p["ln2_b"]).astype(x.dtype)


def transformer_encoder_ref(x, mask, layer_params_list, *, num_heads):
    for params in layer_params_list:
        x = _encoder_layer_ref(x, mask, params, num_heads=num_heads)
    return x


# --------------------------------------------------------------------------
if __name__ == "__main__":
    B, S, D = 2, 16, 32
    num_heads = 4
    d_ff = 64
    num_layers = 2
    block_q = 8                # 2 seq tiles/sequence exercise the (B, S-tile) grid

    key = jax.random.PRNGKey(0)
    kx, km, *kl = jax.random.split(key, 2 + num_layers)
    x = jax.random.normal(kx, (B, S, D), jnp.float32)
    layer_params = [init_layer_params(k, D, d_ff) for k in kl]

    # mask=None path: no mask DMA, no add in-kernel.
    out = transformer_encoder_pallas(x, None, layer_params,
                                     num_heads=num_heads, block_q=block_q)
    jax.block_until_ready(out)
    assert out.shape == (B, S, D)

    # Pure-JAX reference check (exact softmax divide in-kernel -> tight-ish tol).
    ref = transformer_encoder_ref(x, None, layer_params, num_heads=num_heads)
    assert jnp.allclose(out, ref, atol=2e-2, rtol=2e-2), \
        float(jnp.max(jnp.abs(out - ref)))

    # All-zero additive mask [B,1,S,S] must agree with the no-mask path.
    zero_mask = jnp.zeros((B, 1, S, S), jnp.float32)
    out_m0 = transformer_encoder_pallas(x, zero_mask, layer_params,
                                        num_heads=num_heads, block_q=block_q)
    jax.block_until_ready(out_m0)
    assert jnp.allclose(out, out_m0, atol=1e-5, rtol=1e-5)

    # Non-trivial additive padding-style mask (finite large-negative, no NaN rows).
    keep = jax.random.bernoulli(km, 0.8, (B, 1, 1, S)).at[..., 0].set(True)
    mask = jnp.where(jnp.broadcast_to(keep, (B, 1, S, S)), 0.0, -1e9)
    mask = mask.astype(jnp.float32)
    out_mask = transformer_encoder_pallas(x, mask, layer_params,
                                          num_heads=num_heads, block_q=block_q)
    ref_mask = transformer_encoder_ref(x, mask, layer_params, num_heads=num_heads)
    jax.block_until_ready(out_mask)
    assert jnp.allclose(out_mask, ref_mask, atol=2e-2, rtol=2e-2)

    # bf16 smoke test (halved HBM traffic, native bf16 MXU path on v6e/v7x).
    cast16 = lambda t: jax.tree_util.tree_map(lambda a: a.astype(jnp.bfloat16), t)
    out_bf16 = transformer_encoder_pallas(cast16(x), None, cast16(layer_params),
                                          num_heads=num_heads, block_q=16)
    jax.block_until_ready(out_bf16)
    assert out_bf16.dtype == jnp.bfloat16

    # Mixed path: f32 activations, bf16 compute/weights (recommended v6e/v7x recipe).
    out_mixed = transformer_encoder_pallas(x, None, layer_params,
                                           num_heads=num_heads, block_q=block_q,
                                           compute_dtype=jnp.bfloat16)
    jax.block_until_ready(out_mixed)
    assert out_mixed.dtype == jnp.float32
    assert bool(jnp.all(jnp.isfinite(out_mixed)))

    print("KERNEL_OK")
</pallas_src>

<mosaic_0001>
module attributes {stable_mosaic.version = 11 : i64} {
  func.func @_encoder_layer_kernel(%arg0: i32, %arg1: i32, %arg2: memref<1x16x32xf32, #tpu.memory_space<vmem>>, %arg3: memref<32x32xf32, #tpu.memory_space<vmem>>, %arg4: memref<1x32xf32, #tpu.memory_space<vmem>>, %arg5: memref<32x32xf32, #tpu.memory_space<vmem>>, %arg6: memref<1x32xf32, #tpu.memory_space<vmem>>, %arg7: memref<32x32xf32, #tpu.memory_space<vmem>>, %arg8: memref<1x32xf32, #tpu.memory_space<vmem>>, %arg9: memref<32x32xf32, #tpu.memory_space<vmem>>, %arg10: memref<1x32xf32, #tpu.memory_space<vmem>>, %arg11: memref<1x32xf32, #tpu.memory_space<vmem>>, %arg12: memref<1x32xf32, #tpu.memory_space<vmem>>, %arg13: memref<32x64xf32, #tpu.memory_space<vmem>>, %arg14: memref<1x64xf32, #tpu.memory_space<vmem>>, %arg15: memref<64x32xf32, #tpu.memory_space<vmem>>, %arg16: memref<1x32xf32, #tpu.memory_space<vmem>>, %arg17: memref<1x32xf32, #tpu.memory_space<vmem>>, %arg18: memref<1x32xf32, #tpu.memory_space<vmem>>, %arg19: memref<1x8x32xf32, #tpu.memory_space<vmem>>, %arg20: memref<4x16x8xf32, #tpu.memory_space<vmem>>, %arg21: memref<4x16x8xf32, #tpu.memory_space<vmem>>) attributes {dimension_semantics = [#tpu.dimension_semantics<parallel>, #tpu.dimension_semantics<arbitrary>], iteration_bounds = array<i64: 2, 2>, scalar_prefetch = 0 : i64, scratch_operands = 2 : i64, tpu.core_type = #tpu.core_type<tc>, window_params = [{transform_indices = @transform_0, window_bounds = array<i64: 1, 16, 32>}, {pipeline_mode = #tpu.pipeline_mode<synchronous>, transform_indices = @transform_1, window_bounds = array<i64: 32, 32>}, {pipeline_mode = #tpu.pipeline_mode<synchronous>, transform_indices = @transform_2, window_bounds = array<i64: 1, 32>}, {pipeline_mode = #tpu.pipeline_mode<synchronous>, transform_indices = @transform_3, window_bounds = array<i64: 32, 32>}, {pipeline_mode = #tpu.pipeline_mode<synchronous>, transform_indices = @transform_4, window_bounds = array<i64: 1, 32>}, {pipeline_mode = #tpu.pipeline_mode<synchronous>, transform_indices = @transform_5, window_bounds = array<i64: 32, 32>}, {pipeline_mode = #tpu.pipeline_mode<synchronous>, transform_indices = @transform_6, window_bounds = array<i64: 1, 32>}, {pipeline_mode = #tpu.pipeline_mode<synchronous>, transform_indices = @transform_7, window_bounds = array<i64: 32, 32>}, {pipeline_mode = #tpu.pipeline_mode<synchronous>, transform_indices = @transform_8, window_bounds = array<i64: 1, 32>}, {pipeline_mode = #tpu.pipeline_mode<synchronous>, transform_indices = @transform_9, window_bounds = array<i64: 1, 32>}, {pipeline_mode = #tpu.pipeline_mode<synchronous>, transform_indices = @transform_10, window_bounds = array<i64: 1, 32>}, {pipeline_mode = #tpu.pipeline_mode<synchronous>, transform_indices = @transform_11, window_bounds = array<i64: 32, 64>}, {pipeline_mode = #tpu.pipeline_mode<synchronous>, transform_indices = @transform_12, window_bounds = array<i64: 1, 64>}, {pipeline_mode = #tpu.pipeline_mode<synchronous>, transform_indices = @transform_13, window_bounds = array<i64: 64, 32>}, {pipeline_mode = #tpu.pipeline_mode<synchronous>, transform_indices = @transform_14, window_bounds = array<i64: 1, 32>}, {pipeline_mode = #tpu.pipeline_mode<synchronous>, transform_indices = @transform_15, window_bounds = array<i64: 1, 32>}, {pipeline_mode = #tpu.pipeline_mode<synchronous>, transform_indices = @transform_16, window_bounds = array<i64: 1, 32>}, {transform_indices = @transform_17, window_bounds = array<i64: 1, 8, 32>}]} {
    %c0_i32 = arith.constant 0 : i32
    %0 = arith.cmpi eq, %arg1, %c0_i32 : i32
    %1 = arith.extui %0 : i1 to i32
    %c0_i32_0 = arith.constant 0 : i32
    %2 = arith.cmpi ne, %1, %c0_i32_0 : i32
    scf.if %2 {
      %c0_i32_57 = arith.constant 0 : i32
      %c2_i32 = arith.constant 2 : i32
      %117 = arith.addi %c0_i32_57, %c2_i32 : i32
      %c1_i32 = arith.constant 1 : i32
      scf.for %arg22 = %c0_i32_57 to %117 step %c1_i32  : i32 {
        %c8_i32_59 = arith.constant 8 : i32
        %118 = arith.muli %arg22, %c8_i32_59 : i32
        %119 = tpu.assume_multiple %118, 8 : i32
        %c0_60 = arith.constant 0 : index
        %120 = arith.index_cast %119 : i32 to index
        %c0_61 = arith.constant 0 : index
        %121 = vector.load %arg2[%c0_60, %120, %c0_61] : memref<1x16x32xf32, #tpu.memory_space<vmem>>, vector<1x8x32xf32>
        %122 = vector.shape_cast %121 : vector<1x8x32xf32> to vector<8x32xf32>
        %c0_62 = arith.constant 0 : index
        %c0_63 = arith.constant 0 : index
        %123 = vector.load %arg5[%c0_62, %c0_63] : memref<32x32xf32, #tpu.memory_space<vmem>>, vector<32x32xf32>
        %cst_64 = arith.constant dense<0.000000e+00> : vector<8x32xf32>
        %124 = tpu.matmul %122, %123, %cst_64 {dimension_numbers = #tpu.dot_dimension_numbers<[1], [0], [0], [1], [0, 0, 1, 1], [], []>} : vector<8x32xf32>, vector<32x32xf32>, vector<8x32xf32> -> vector<8x32xf32>
        %c0_65 = arith.constant 0 : index
        %c0_66 = arith.constant 0 : index
        %125 = vector.load %arg6[%c0_65, %c0_66] : memref<1x32xf32, #tpu.memory_space<vmem>>, vector<1x32xf32>
        %126 = vector.broadcast %125 : vector<1x32xf32> to vector<8x32xf32>
        %127 = arith.addf %124, %126 : vector<8x32xf32>
        %c0_67 = arith.constant 0 : index
        %c0_68 = arith.constant 0 : index
        %128 = vector.load %arg7[%c0_67, %c0_68] : memref<32x32xf32, #tpu.memory_space<vmem>>, vector<32x32xf32>
        %cst_69 = arith.constant dense<0.000000e+00> : vector<8x32xf32>
        %129 = tpu.matmul %122, %128, %cst_69 {dimension_numbers = #tpu.dot_dimension_numbers<[1], [0], [0], [1], [0, 0, 1, 1], [], []>} : vector<8x32xf32>, vector<32x32xf32>, vector<8x32xf32> -> vector<8x32xf32>
        %c0_70 = arith.constant 0 : index
        %c0_71 = arith.constant 0 : index
        %130 = vector.load %arg8[%c0_70, %c0_71] : memref<1x32xf32, #tpu.memory_space<vmem>>, vector<1x32xf32>
        %131 = vector.broadcast %130 : vector<1x32xf32> to vector<8x32xf32>
        %132 = arith.addf %129, %131 : vector<8x32xf32>
        %133 = vector.shape_cast %127 : vector<8x32xf32> to vector<8x4x8xf32>
        %134 = tpu.transpose %133, [1, 0, 2] : vector<8x4x8xf32> -> vector<4x8x8xf32>
        %c0_72 = arith.constant 0 : index
        %135 = arith.index_cast %119 : i32 to index
        %c0_73 = arith.constant 0 : index
        %136 = vector.load %arg20[%c0_72, %135, %c0_73] : memref<4x16x8xf32, #tpu.memory_space<vmem>>, vector<4x8x8xf32>
        tpu.vector_store %arg20[%c0_72, %135, %c0_73], %134 {strides = array<i32>} : memref<4x16x8xf32, #tpu.memory_space<vmem>>, vector<4x8x8xf32>,
        %137 = vector.shape_cast %132 : vector<8x32xf32> to vector<8x4x8xf32>
        %138 = tpu.transpose %137, [1, 0, 2] : vector<8x4x8xf32> -> vector<4x8x8xf32>
        %c0_74 = arith.constant 0 : index
        %139 = arith.index_cast %119 : i32 to index
        %c0_75 = arith.constant 0 : index
        %140 = vector.load %arg21[%c0_74, %139, %c0_75] : memref<4x16x8xf32, #tpu.memory_space<vmem>>, vector<4x8x8xf32>
        tpu.vector_store %arg21[%c0_74, %139, %c0_75], %138 {strides = array<i32>} : memref<4x16x8xf32, #tpu.memory_space<vmem>>, vector<4x8x8xf32>,
      }
      %c2_i32_58 = arith.constant 2 : i32
    } else {
    }
    %c8_i32 = arith.constant 8 : i32
    %3 = arith.muli %arg1, %c8_i32 : i32
    %4 = tpu.assume_multiple %3, 8 : i32
    %c0 = arith.constant 0 : index
    %5 = arith.index_cast %4 : i32 to index
    %c0_1 = arith.constant 0 : index
    %6 = vector.load %arg2[%c0, %5, %c0_1] : memref<1x16x32xf32, #tpu.memory_space<vmem>>, vector<1x8x32xf32>
    %7 = vector.shape_cast %6 : vector<1x8x32xf32> to vector<8x32xf32>
    %c0_2 = arith.constant 0 : index
    %c0_3 = arith.constant 0 : index
    %8 = vector.load %arg3[%c0_2, %c0_3] : memref<32x32xf32, #tpu.memory_space<vmem>>, vector<32x32xf32>
    %cst = arith.constant dense<0.000000e+00> : vector<8x32xf32>
    %9 = tpu.matmul %7, %8, %cst {dimension_numbers = #tpu.dot_dimension_numbers<[1], [0], [0], [1], [0, 0, 1, 1], [], []>} : vector<8x32xf32>, vector<32x32xf32>, vector<8x32xf32> -> vector<8x32xf32>
    %c0_4 = arith.constant 0 : index
    %c0_5 = arith.constant 0 : index
    %10 = vector.load %arg4[%c0_4, %c0_5] : memref<1x32xf32, #tpu.memory_space<vmem>>, vector<1x32xf32>
    %11 = vector.broadcast %10 : vector<1x32xf32> to vector<8x32xf32>
    %12 = arith.addf %9, %11 : vector<8x32xf32>
    %cst_6 = arith.constant 0.353553385 : f32
    %13 = vector.broadcast %cst_6 : f32 to vector<8x32xf32>
    %14 = arith.mulf %12, %13 : vector<8x32xf32>
    %15 = vector.shape_cast %14 : vector<8x32xf32> to vector<8x4x8xf32>
    %16 = tpu.transpose %15, [1, 0, 2] : vector<8x4x8xf32> -> vector<4x8x8xf32>
    %cst_7 = arith.constant 0xFF800000 : f32
    %17 = vector.broadcast %cst_7 : f32 to vector<4x8x1xf32>
    %cst_8 = arith.constant 0.000000e+00 : f32
    %18 = vector.broadcast %cst_8 : f32 to vector<4x8x1xf32>
    %cst_9 = arith.constant 0.000000e+00 : f32
    %19 = vector.broadcast %cst_9 : f32 to vector<4x8x8xf32>
    %c0_10 = arith.constant 0 : index
    %c0_11 = arith.constant 0 : index
    %c0_12 = arith.constant 0 : index
    %20 = vector.load %arg20[%c0_10, %c0_11, %c0_12] : memref<4x16x8xf32, #tpu.memory_space<vmem>>, vector<4x16x8xf32>
    %c0_13 = arith.constant 0 : index
    %c0_14 = arith.constant 0 : index
    %c0_15 = arith.constant 0 : index
    %21 = vector.load %arg21[%c0_13, %c0_14, %c0_15] : memref<4x16x8xf32, #tpu.memory_space<vmem>>, vector<4x16x8xf32>
    "tpu.trace_start"() <{level = 10 : i32, message = "hqd,hkd->hqk"}> : () -> ()
    %cst_16 = arith.constant dense<0.000000e+00> : vector<4x8x16xf32>
    %22 = tpu.matmul %16, %20, %cst_16 {dimension_numbers = #tpu.dot_dimension_numbers<[2], [2], [1], [1], [0, 0, 0, 1, 1, 1], [0], [0]>} : vector<4x8x8xf32>, vector<4x16x8xf32>, vector<4x8x16xf32> -> vector<4x8x16xf32>
    "tpu.trace_stop"() : () -> ()
    %cst_17 = arith.constant dense<0xFF800000> : vector<4x8xf32>
    %23 = vector.multi_reduction <maximumf>, %22, %cst_17 [2] : vector<4x8x16xf32> to vector<4x8xf32>
    %24 = vector.shape_cast %23 : vector<4x8xf32> to vector<4x8x1xf32>
    %25 = arith.maximumf %17, %24 : vector<4x8x1xf32>
    %26 = arith.subf %17, %25 : vector<4x8x1xf32>
    %27 = math.exp %26 : vector<4x8x1xf32>
    %28 = vector.broadcast %25 : vector<4x8x1xf32> to vector<4x8x16xf32>
    %29 = arith.subf %22, %28 : vector<4x8x16xf32>
    %30 = math.exp %29 : vector<4x8x16xf32>
    %31 = arith.mulf %27, %18 : vector<4x8x1xf32>
    %cst_18 = arith.constant dense<0.000000e+00> : vector<4x8xf32>
    %32 = vector.multi_reduction <add>, %30, %cst_18 [2] : vector<4x8x16xf32> to vector<4x8xf32>
    %33 = vector.shape_cast %32 : vector<4x8xf32> to vector<4x8x1xf32>
    %34 = arith.addf %31, %33 : vector<4x8x1xf32>
    %35 = vector.broadcast %27 : vector<4x8x1xf32> to vector<4x8x8xf32>
    %36 = arith.mulf %35, %19 : vector<4x8x8xf32>
    "tpu.trace_start"() <{level = 10 : i32, message = "hqk,hkd->hqd"}> : () -> ()
    %cst_19 = arith.constant dense<0.000000e+00> : vector<4x8x8xf32>
    %37 = tpu.matmul %30, %21, %cst_19 {dimension_numbers = #tpu.dot_dimension_numbers<[2], [1], [1], [2], [0, 0, 0, 1, 1, 2], [0], [0]>} : vector<4x8x16xf32>, vector<4x16x8xf32>, vector<4x8x8xf32> -> vector<4x8x8xf32>
    "tpu.trace_stop"() : () -> ()
    %38 = arith.addf %36, %37 : vector<4x8x8xf32>
    %39 = vector.broadcast %34 : vector<4x8x1xf32> to vector<4x8x8xf32>
    %40 = arith.divf %38, %39 : vector<4x8x8xf32>
    %41 = tpu.transpose %40, [1, 0, 2] : vector<4x8x8xf32> -> vector<8x4x8xf32>
    %42 = vector.shape_cast %41 : vector<8x4x8xf32> to vector<8x32xf32>
    %c0_20 = arith.constant 0 : index
    %c0_21 = arith.constant 0 : index
    %43 = vector.load %arg9[%c0_20, %c0_21] : memref<32x32xf32, #tpu.memory_space<vmem>>, vector<32x32xf32>
    %cst_22 = arith.constant dense<0.000000e+00> : vector<8x32xf32>
    %44 = tpu.matmul %42, %43, %cst_22 {dimension_numbers = #tpu.dot_dimension_numbers<[1], [0], [0], [1], [0, 0, 1, 1], [], []>} : vector<8x32xf32>, vector<32x32xf32>, vector<8x32xf32> -> vector<8x32xf32>
    %c0_23 = arith.constant 0 : index
    %c0_24 = arith.constant 0 : index
    %45 = vector.load %arg10[%c0_23, %c0_24] : memref<1x32xf32, #tpu.memory_space<vmem>>, vector<1x32xf32>
    %46 = vector.broadcast %45 : vector<1x32xf32> to vector<8x32xf32>
    %47 = arith.addf %44, %46 : vector<8x32xf32>
    %48 = arith.addf %7, %47 : vector<8x32xf32>
    %cst_25 = arith.constant dense<0.000000e+00> : vector<8xf32>
    %49 = vector.multi_reduction <add>, %48, %cst_25 [1] : vector<8x32xf32> to vector<8xf32>
    %50 = vector.shape_cast %49 : vector<8xf32> to vector<8x1xf32>
    %cst_26 = arith.constant 3.200000e+01 : f32
    %51 = vector.broadcast %cst_26 : f32 to vector<8x1xf32>
    %52 = arith.divf %50, %51 : vector<8x1xf32>
    %53 = vector.broadcast %52 : vector<8x1xf32> to vector<8x32xf32>
    %54 = arith.subf %48, %53 : vector<8x32xf32>
    %55 = vector.broadcast %52 : vector<8x1xf32> to vector<8x32xf32>
    %56 = arith.subf %48, %55 : vector<8x32xf32>
    %57 = arith.mulf %54, %56 : vector<8x32xf32>
    %cst_27 = arith.constant dense<0.000000e+00> : vector<8xf32>
    %58 = vector.multi_reduction <add>, %57, %cst_27 [1] : vector<8x32xf32> to vector<8xf32>
    %59 = vector.shape_cast %58 : vector<8xf32> to vector<8x1xf32>
    %cst_28 = arith.constant 3.200000e+01 : f32
    %60 = vector.broadcast %cst_28 : f32 to vector<8x1xf32>
    %61 = arith.divf %59, %60 : vector<8x1xf32>
    %62 = vector.broadcast %52 : vector<8x1xf32> to vector<8x32xf32>
    %63 = arith.subf %48, %62 : vector<8x32xf32>
    %cst_29 = arith.constant 9.99999974E-6 : f32
    %64 = vector.broadcast %cst_29 : f32 to vector<8x1xf32>
    %65 = arith.addf %61, %64 : vector<8x1xf32>
    %66 = math.rsqrt %65 : vector<8x1xf32>
    %67 = vector.broadcast %66 : vector<8x1xf32> to vector<8x32xf32>
    %68 = arith.mulf %63, %67 : vector<8x32xf32>
    %c0_30 = arith.constant 0 : index
    %c0_31 = arith.constant 0 : index
    %69 = vector.load %arg11[%c0_30, %c0_31] : memref<1x32xf32, #tpu.memory_space<vmem>>, vector<1x32xf32>
    %70 = vector.broadcast %69 : vector<1x32xf32> to vector<8x32xf32>
    %71 = arith.mulf %68, %70 : vector<8x32xf32>
    %c0_32 = arith.constant 0 : index
    %c0_33 = arith.constant 0 : index
    %72 = vector.load %arg12[%c0_32, %c0_33] : memref<1x32xf32, #tpu.memory_space<vmem>>, vector<1x32xf32>
    %73 = vector.broadcast %72 : vector<1x32xf32> to vector<8x32xf32>
    %74 = arith.addf %71, %73 : vector<8x32xf32>
    %c0_34 = arith.constant 0 : index
    %c0_35 = arith.constant 0 : index
    %75 = vector.load %arg13[%c0_34, %c0_35] : memref<32x64xf32, #tpu.memory_space<vmem>>, vector<32x64xf32>
    %cst_36 = arith.constant dense<0.000000e+00> : vector<8x64xf32>
    %76 = tpu.matmul %74, %75, %cst_36 {dimension_numbers = #tpu.dot_dimension_numbers<[1], [0], [0], [1], [0, 0, 1, 1], [], []>} : vector<8x32xf32>, vector<32x64xf32>, vector<8x64xf32> -> vector<8x64xf32>
    %c0_37 = arith.constant 0 : index
    %c0_38 = arith.constant 0 : index
    %77 = vector.load %arg14[%c0_37, %c0_38] : memref<1x64xf32, #tpu.memory_space<vmem>>, vector<1x64xf32>
    %78 = vector.broadcast %77 : vector<1x64xf32> to vector<8x64xf32>
    %79 = arith.addf %76, %78 : vector<8x64xf32>
    %cst_39 = arith.constant 0.000000e+00 : f32
    %80 = vector.broadcast %cst_39 : f32 to vector<8x64xf32>
    %81 = arith.maximumf %79, %80 : vector<8x64xf32>
    %c0_40 = arith.constant 0 : index
    %c0_41 = arith.constant 0 : index
    %82 = vector.load %arg15[%c0_40, %c0_41] : memref<64x32xf32, #tpu.memory_space<vmem>>, vector<64x32xf32>
    %cst_42 = arith.constant dense<0.000000e+00> : vector<8x32xf32>
    %83 = tpu.matmul %81, %82, %cst_42 {dimension_numbers = #tpu.dot_dimension_numbers<[1], [0], [0], [1], [0, 0, 1, 1], [], []>} : vector<8x64xf32>, vector<64x32xf32>, vector<8x32xf32> -> vector<8x32xf32>
    %c0_43 = arith.constant 0 : index
    %c0_44 = arith.constant 0 : index
    %84 = vector.load %arg16[%c0_43, %c0_44] : memref<1x32xf32, #tpu.memory_space<vmem>>, vector<1x32xf32>
    %85 = vector.broadcast %84 : vector<1x32xf32> to vector<8x32xf32>
    %86 = arith.addf %83, %85 : vector<8x32xf32>
    %87 = arith.addf %74, %86 : vector<8x32xf32>
    %cst_45 = arith.constant dense<0.000000e+00> : vector<8xf32>
    %88 = vector.multi_reduction <add>, %87, %cst_45 [1] : vector<8x32xf32> to vector<8xf32>
    %89 = vector.shape_cast %88 : vector<8xf32> to vector<8x1xf32>
    %cst_46 = arith.constant 3.200000e+01 : f32
    %90 = vector.broadcast %cst_46 : f32 to vector<8x1xf32>
    %91 = arith.divf %89, %90 : vector<8x1xf32>
    %92 = vector.broadcast %91 : vector<8x1xf32> to vector<8x32xf32>
    %93 = arith.subf %87, %92 : vector<8x32xf32>
    %94 = vector.broadcast %91 : vector<8x1xf32> to vector<8x32xf32>
    %95 = arith.subf %87, %94 : vector<8x32xf32>
    %96 = arith.mulf %93, %95 : vector<8x32xf32>
    %cst_47 = arith.constant dense<0.000000e+00> : vector<8xf32>
    %97 = vector.multi_reduction <add>, %96, %cst_47 [1] : vector<8x32xf32> to vector<8xf32>
    %98 = vector.shape_cast %97 : vector<8xf32> to vector<8x1xf32>
    %cst_48 = arith.constant 3.200000e+01 : f32
    %99 = vector.broadcast %cst_48 : f32 to vector<8x1xf32>
    %100 = arith.divf %98, %99 : vector<8x1xf32>
    %101 = vector.broadcast %91 : vector<8x1xf32> to vector<8x32xf32>
    %102 = arith.subf %87, %101 : vector<8x32xf32>
    %cst_49 = arith.constant 9.99999974E-6 : f32
    %103 = vector.broadcast %cst_49 : f32 to vector<8x1xf32>
    %104 = arith.addf %100, %103 : vector<8x1xf32>
    %105 = math.rsqrt %104 : vector<8x1xf32>
    %106 = vector.broadcast %105 : vector<8x1xf32> to vector<8x32xf32>
    %107 = arith.mulf %102, %106 : vector<8x32xf32>
    %c0_50 = arith.constant 0 : index
    %c0_51 = arith.constant 0 : index
    %108 = vector.load %arg17[%c0_50, %c0_51] : memref<1x32xf32, #tpu.memory_space<vmem>>, vector<1x32xf32>
    %109 = vector.broadcast %108 : vector<1x32xf32> to vector<8x32xf32>
    %110 = arith.mulf %107, %109 : vector<8x32xf32>
    %c0_52 = arith.constant 0 : index
    %c0_53 = arith.constant 0 : index
    %111 = vector.load %arg18[%c0_52, %c0_53] : memref<1x32xf32, #tpu.memory_space<vmem>>, vector<1x32xf32>
    %112 = vector.broadcast %111 : vector<1x32xf32> to vector<8x32xf32>
    %113 = arith.addf %110, %112 : vector<8x32xf32>
    %c0_54 = arith.constant 0 : index
    %c0_55 = arith.constant 0 : index
    %c0_56 = arith.constant 0 : index
    %114 = vector.load %arg19[%c0_54, %c0_55, %c0_56] : memref<1x8x32xf32, #tpu.memory_space<vmem>>, vector<1x8x32xf32>
    %115 = vector.shape_cast %114 : vector<1x8x32xf32> to vector<8x32xf32>
    %116 = vector.shape_cast %113 : vector<8x32xf32> to vector<1x8x32xf32>
    tpu.vector_store %arg19[%c0_54, %c0_55, %c0_56], %116 {strides = array<i32>} : memref<1x8x32xf32, #tpu.memory_space<vmem>>, vector<1x8x32xf32>,
    return
  }
  func.func @transform_0(%arg0: i32, %arg1: i32) -> (i32, i32, i32) {
    %c0_i32 = arith.constant 0 : i32
    %c0_i32_0 = arith.constant 0 : i32
    %c0_i32_1 = arith.constant 0 : i32
    return %arg0, %c0_i32, %c0_i32_0 : i32, i32, i32
  }
  func.func @transform_1(%arg0: i32, %arg1: i32) -> (i32, i32) {
    %c0_i32 = arith.constant 0 : i32
    %c0_i32_0 = arith.constant 0 : i32
    %c0_i32_1 = arith.constant 0 : i32
    return %c0_i32, %c0_i32_0 : i32, i32
  }
  func.func @transform_2(%arg0: i32, %arg1: i32) -> (i32, i32) {
    %c0_i32 = arith.constant 0 : i32
    %c0_i32_0 = arith.constant 0 : i32
    %c0_i32_1 = arith.constant 0 : i32
    return %c0_i32, %c0_i32_0 : i32, i32
  }
  func.func @transform_3(%arg0: i32, %arg1: i32) -> (i32, i32) {
    %c0_i32 = arith.constant 0 : i32
    %c0_i32_0 = arith.constant 0 : i32
    %c0_i32_1 = arith.constant 0 : i32
    return %c0_i32, %c0_i32_0 : i32, i32
  }
  func.func @transform_4(%arg0: i32, %arg1: i32) -> (i32, i32) {
    %c0_i32 = arith.constant 0 : i32
    %c0_i32_0 = arith.constant 0 : i32
    %c0_i32_1 = arith.constant 0 : i32
    return %c0_i32, %c0_i32_0 : i32, i32
  }
  func.func @transform_5(%arg0: i32, %arg1: i32) -> (i32, i32) {
    %c0_i32 = arith.constant 0 : i32
    %c0_i32_0 = arith.constant 0 : i32
    %c0_i32_1 = arith.constant 0 : i32
    return %c0_i32, %c0_i32_0 : i32, i32
  }
  func.func @transform_6(%arg0: i32, %arg1: i32) -> (i32, i32) {
    %c0_i32 = arith.constant 0 : i32
    %c0_i32_0 = arith.constant 0 : i32
    %c0_i32_1 = arith.constant 0 : i32
    return %c0_i32, %c0_i32_0 : i32, i32
  }
  func.func @transform_7(%arg0: i32, %arg1: i32) -> (i32, i32) {
    %c0_i32 = arith.constant 0 : i32
    %c0_i32_0 = arith.constant 0 : i32
    %c0_i32_1 = arith.constant 0 : i32
    return %c0_i32, %c0_i32_0 : i32, i32
  }
  func.func @transform_8(%arg0: i32, %arg1: i32) -> (i32, i32) {
    %c0_i32 = arith.constant 0 : i32
    %c0_i32_0 = arith.constant 0 : i32
    %c0_i32_1 = arith.constant 0 : i32
    return %c0_i32, %c0_i32_0 : i32, i32
  }
  func.func @transform_9(%arg0: i32, %arg1: i32) -> (i32, i32) {
    %c0_i32 = arith.constant 0 : i32
    %c0_i32_0 = arith.constant 0 : i32
    %c0_i32_1 = arith.constant 0 : i32
    return %c0_i32, %c0_i32_0 : i32, i32
  }
  func.func @transform_10(%arg0: i32, %arg1: i32) -> (i32, i32) {
    %c0_i32 = arith.constant 0 : i32
    %c0_i32_0 = arith.constant 0 : i32
    %c0_i32_1 = arith.constant 0 : i32
    return %c0_i32, %c0_i32_0 : i32, i32
  }
  func.func @transform_11(%arg0: i32, %arg1: i32) -> (i32, i32) {
    %c0_i32 = arith.constant 0 : i32
    %c0_i32_0 = arith.constant 0 : i32
    %c0_i32_1 = arith.constant 0 : i32
    return %c0_i32, %c0_i32_0 : i32, i32
  }
  func.func @transform_12(%arg0: i32, %arg1: i32) -> (i32, i32) {
    %c0_i32 = arith.constant 0 : i32
    %c0_i32_0 = arith.constant 0 : i32
    %c0_i32_1 = arith.constant 0 : i32
    return %c0_i32, %c0_i32_0 : i32, i32
  }
  func.func @transform_13(%arg0: i32, %arg1: i32) -> (i32, i32) {
    %c0_i32 = arith.constant 0 : i32
    %c0_i32_0 = arith.constant 0 : i32
    %c0_i32_1 = arith.constant 0 : i32
    return %c0_i32, %c0_i32_0 : i32, i32
  }
  func.func @transform_14(%arg0: i32, %arg1: i32) -> (i32, i32) {
    %c0_i32 = arith.constant 0 : i32
    %c0_i32_0 = arith.constant 0 : i32
    %c0_i32_1 = arith.constant 0 : i32
    return %c0_i32, %c0_i32_0 : i32, i32
  }
  func.func @transform_15(%arg0: i32, %arg1: i32) -> (i32, i32) {
    %c0_i32 = arith.constant 0 : i32
    %c0_i32_0 = arith.constant 0 : i32
    %c0_i32_1 = arith.constant 0 : i32
    return %c0_i32, %c0_i32_0 : i32, i32
  }
  func.func @transform_16(%arg0: i32, %arg1: i32) -> (i32, i32) {
    %c0_i32 = arith.constant 0 : i32
    %c0_i32_0 = arith.constant 0 : i32
    %c0_i32_1 = arith.constant 0 : i32
    return %c0_i32, %c0_i32_0 : i32, i32
  }
  func.func @transform_17(%arg0: i32, %arg1: i32) -> (i32, i32, i32) {
    %c0_i32 = arith.constant 0 : i32
    %c0_i32_0 = arith.constant 0 : i32
    return %arg0, %arg1, %c0_i32 : i32, i32, i32
  }
}

</mosaic_0001>

<llo_original>
// kernel: tpu_custom_call.1
$region0: #{tpu_custom_call.1}
  #allocation0 [shape = 'u32[]', space=smem, size = 0x4, offset = 0x4, fixed_abs, tag = 'smem constant byte address 0x4 - core index']
  #allocation1 [shape = 'u32[72,128]{1,0:T(1,128)}', space=vmem, size = 0x9000, scoped, tag = 'internal scratch']
  #allocation2 [shape = 'f32[4,16,8]{2,1,0:T(8,128)}', space=vmem, size = 0x8000, scoped, tag = 'scratch operand']
  #allocation3 [shape = 'f32[4,16,8]{2,1,0:T(8,128)}', space=vmem, size = 0x8000, scoped, tag = 'scratch operand']
  %s0 = inlined_call_operand.vmem [shape: f32[2,16,32], index: 0, kind: input, shape index: {}]
  %s1 = inlined_call_operand.vmem [shape: f32[32,32], index: 1, kind: input, shape index: {}]
  %s2 = inlined_call_operand.vmem [shape: f32[1,32], index: 2, kind: input, shape index: {}]
  %s3 = inlined_call_operand.vmem [shape: f32[32,32], index: 3, kind: input, shape index: {}]
  %s4 = inlined_call_operand.vmem [shape: f32[1,32], index: 4, kind: input, shape index: {}]
  %s5 = inlined_call_operand.hbm [shape: f32[32,32], index: 5, kind: input, shape index: {}]
  %s6 = inlined_call_operand.vmem [shape: f32[1,32], index: 6, kind: input, shape index: {}]
  %s7 = inlined_call_operand.hbm [shape: f32[32,32], index: 7, kind: input, shape index: {}]
  %s8 = inlined_call_operand.vmem [shape: f32[1,32], index: 8, kind: input, shape index: {}]
  %s9 = inlined_call_operand.vmem [shape: f32[1,32], index: 9, kind: input, shape index: {}]
  %s10 = inlined_call_operand.vmem [shape: f32[1,32], index: 10, kind: input, shape index: {}]
  %s11 = inlined_call_operand.hbm [shape: f32[32,64], index: 11, kind: input, shape index: {}]
  %s12 = inlined_call_operand.vmem [shape: f32[1,64], index: 12, kind: input, shape index: {}]
  %s13 = inlined_call_operand.vmem [shape: f32[64,32], index: 13, kind: input, shape index: {}]
  %s14 = inlined_call_operand.vmem [shape: f32[1,32], index: 14, kind: input, shape index: {}]
  %s15 = inlined_call_operand.vmem [shape: f32[1,32], index: 15, kind: input, shape index: {}]
  %s16 = inlined_call_operand.vmem [shape: f32[1,32], index: 16, kind: input, shape index: {}]
  %s17 = inlined_call_operand.hbm [shape: f32[2,16,32], index: 17, kind: output, shape index: {}]
  %s18 = sld [smem:[#allocation0]]
  $region124: #{tpu_custom_call.1} parent=0
    _
  %s20 = ssub.s32 1, %s18
  %s21 = scalar_select 0, %s20, %s18
  $region1: #{tpu_custom_call.1} parent=0
    #allocation4 [shape = 'u8[16384]{0}', space=vmem, size = 0x4000, scoped, tag = 'input window, operand 5, single buffered']
    #allocation5 [shape = 's32[2]{0}', space=sflag, size = 0x8, scoped, tag = 'scoped memory for tpu_custom_call.1']
    #allocation6 [shape = 's32[2]{0}', space=sflag, size = 0x8, scoped, tag = 'scoped memory for tpu_custom_call.1']
    #allocation7 [shape = 'u8[16384]{0}', space=vmem, size = 0x4000, scoped, tag = 'input window, operand 7, single buffered']
    #allocation8 [shape = 's32[1]{0}', space=sflag, size = 0x4, scoped, tag = 'scoped memory for tpu_custom_call.1']
    #allocation9 [shape = 'u8[16384]{0}', space=vmem, size = 0x4000, scoped, tag = 'input window, operand 11, single buffered']
    #allocation10 [shape = 'u8[8192]{0}', space=vmem, size = 0x2000, scoped, tag = 'output window, operand 0']
    %22 = vsyncpa [#allocation5], 0
    %23 = vsyncpa [#allocation8], 0
    %24 = vsyncpa [#allocation6], 0
    %s25 = scalar_lea.sflag [#allocation6], 1
    %26 = vsyncpa %s25, 0
    loop: start=0, step=1, limit=6
    $region2: #{tpu_custom_call.1} parent=1 // loop_pre_header
      _
    $region3: #{tpu_custom_call.1} parent=1 // loop_header
      %s28 = sphi 0, %s32
      %p29 = scmp.ge.s32.totalorder %s28, 6
      %s35 = sphi 0, %s47
      %s36 = sphi 0, %s43
      %s37 = sphi 0, %s35
      %s38 = sphi 0, %s36
      %s39 = sphi 0, %s37
      %s40 = sphi 0, %s38
      %s50 = sphi 0, %s52
      %s53 = sphi 0, %s50
      %s54 = sphi 0, %s53
      %s70 = sphi 0, %s54
      %s74 = sphi 0, %s74
      %s76 = sphi 0, %s74
      %s77 = sphi 0, %s76
      %s91 = sphi 0, %s77
      %s95 = sphi 0, %s95
      %s97 = sphi 0, %s95
      %s98 = sphi 0, %s97
      %s112 = sphi 0, %s98
      %s116 = sphi 0, %s116
      %s118 = sphi 0, %s116
      %s119 = sphi 0, %s118
      %s133 = sphi 0, %s119
      %s137 = sphi 0, %s137
      %s139 = sphi 0, %s137
      %s140 = sphi 0, %s139
      %s154 = sphi 0, %s140
      %s158 = sphi 0, %s158
      %s160 = sphi 0, %s158
      %s161 = sphi 0, %s160
      %s175 = sphi 0, %s161
      %s179 = sphi 0, %s179
      %s181 = sphi 0, %s179
      %s182 = sphi 0, %s181
      %s196 = sphi 0, %s182
      %s200 = sphi 0, %s200
      %s202 = sphi 0, %s200
      %s203 = sphi 0, %s202
      %s217 = sphi 0, %s203
      %s221 = sphi 0, %s221
      %s223 = sphi 0, %s221
      %s224 = sphi 0, %s223
      %s238 = sphi 0, %s224
      %s242 = sphi 0, %s242
      %s244 = sphi 0, %s242
      %s245 = sphi 0, %s244
      %s259 = sphi 0, %s245
      %s263 = sphi 0, %s263
      %s265 = sphi 0, %s263
      %s266 = sphi 0, %s265
      %s280 = sphi 0, %s266
      %s284 = sphi 0, %s284
      %s286 = sphi 0, %s284
      %s287 = sphi 0, %s286
      %s301 = sphi 0, %s287
      %s305 = sphi 0, %s305
      %s307 = sphi 0, %s305
      %s308 = sphi 0, %s307
      %s322 = sphi 0, %s308
      %s326 = sphi 0, %s326
      %s328 = sphi 0, %s326
      %s329 = sphi 0, %s328
      %s343 = sphi 0, %s329
      %s347 = sphi 0, %s347
      %s349 = sphi 0, %s347
      %s350 = sphi 0, %s349
      %s364 = sphi 0, %s350
      %s368 = sphi 0, %s368
      %s370 = sphi 0, %s368
      %s371 = sphi 0, %s370
      %s385 = sphi 0, %s371
      %s389 = sphi 0, %s389
      %s391 = sphi 0, %s389
      %s392 = sphi 0, %s391
      %s406 = sphi 0, %s392
      %s414 = sphi 0, %s416
      %s417 = sphi 0, %s414
      %s418 = sphi 0, %s417
      %s434 = sphi 0, %s418
    $region4: #{tpu_custom_call.1} parent=1 // loop_header_branch
      %31 = sbr.rel (%p29) target = $region8
    $region5: #{tpu_custom_call.1} parent=1 // loop_body
      %s33 = ssub.s32 %s28, 1
      %s34 = ssub.s32 %s28, 2
      %s41 = sadd.s32 1, %s36
      %p42 = scmp.ge.s32.totalorder %s41, 2
      %s43 = scalar_select %p42, 0, %s41
      %s44 = sadd.s32 1, %s35
      %s45 = scalar_select %p42, %s44, %s35
      %p46 = scmp.ge.s32.totalorder %s45, 2
      %s47 = scalar_select %p46, 0, %s45
      %s48 = ssub.s32 %s35, %s47
      %p49 = scmp.eq.s32.totalorder %s48, 0
      %s51 = sadd.s32 %s50, 1
      %s52 = scalar_select %p49, %s50, %s51
      %p55 = pneg %p49
      %p56 = scmp.eq.s32.totalorder %s28, 3
      %p57 = por %p55, %p56
      %p58 = scmp.ne.s32.totalorder %s50, %s53
      %p59 = scmp.eq.s32.totalorder %s28, 0
      %p60 = por %p58, %p59
      %p61 = scmp.ne.s32.totalorder %s50, %s53
      %p62 = scmp.eq.s32.totalorder %s33, 3
      %p63 = por %p61, %p62
      %p64 = scmp.ne.s32.totalorder %s53, %s54
      %p65 = scmp.eq.s32.totalorder %s33, 0
      %p66 = por %p64, %p65
      %p67 = scmp.ne.s32.totalorder %s53, %s54
      %p68 = scmp.eq.s32.totalorder %s34, 3
      %p69 = por %p67, %p68
      %p71 = scmp.ne.s32.totalorder %s54, %s70
      %p72 = scmp.eq.s32.totalorder %s34, 0
      %p73 = por %p71, %p72
      %s75 = sadd.s32 %s74, 1
      %p78 = scmp.eq.s32.totalorder %s28, 3
      %p79 = scmp.ne.s32.totalorder %s74, %s76
      %p80 = scmp.eq.s32.totalorder %s28, 0
      %p81 = por %p79, %p80
      %p82 = scmp.ne.s32.totalorder %s74, %s76
      %p83 = scmp.eq.s32.totalorder %s33, 3
      %p84 = por %p82, %p83
      %p85 = scmp.ne.s32.totalorder %s76, %s77
      %p86 = scmp.eq.s32.totalorder %s33, 0
      %p87 = por %p85, %p86
      %p88 = scmp.ne.s32.totalorder %s76, %s77
      %p89 = scmp.eq.s32.totalorder %s34, 3
      %p90 = por %p88, %p89
      %p92 = scmp.ne.s32.totalorder %s77, %s91
      %p93 = scmp.eq.s32.totalorder %s34, 0
      %p94 = por %p92, %p93
      %s96 = sadd.s32 %s95, 1
      %p99 = scmp.eq.s32.totalorder %s28, 3
      %p100 = scmp.ne.s32.totalorder %s95, %s97
      %p101 = scmp.eq.s32.totalorder %s28, 0
      %p102 = por %p100, %p101
      %p103 = scmp.ne.s32.totalorder %s95, %s97
      %p104 = scmp.eq.s32.totalorder %s33, 3
      %p105 = por %p103, %p104
      %p106 = scmp.ne.s32.totalorder %s97, %s98
      %p107 = scmp.eq.s32.totalorder %s33, 0
      %p108 = por %p106, %p107
      %p109 = scmp.ne.s32.totalorder %s97, %s98
      %p110 = scmp.eq.s32.totalorder %s34, 3
      %p111 = por %p109, %p110
      %p113 = scmp.ne.s32.totalorder %s98, %s112
      %p114 = scmp.eq.s32.totalorder %s34, 0
      %p115 = por %p113, %p114
      %s117 = sadd.s32 %s116, 1
      %p120 = scmp.eq.s32.totalorder %s28, 3
      %p121 = scmp.ne.s32.totalorder %s116, %s118
      %p122 = scmp.eq.s32.totalorder %s28, 0
      %p123 = por %p121, %p122
      %p124 = scmp.ne.s32.totalorder %s116, %s118
      %p125 = scmp.eq.s32.totalorder %s33, 3
      %p126 = por %p124, %p125
      %p127 = scmp.ne.s32.totalorder %s118, %s119
      %p128 = scmp.eq.s32.totalorder %s33, 0
      %p129 = por %p127, %p128
      %p130 = scmp.ne.s32.totalorder %s118, %s119
      %p131 = scmp.eq.s32.totalorder %s34, 3
      %p132 = por %p130, %p131
      %p134 = scmp.ne.s32.totalorder %s119, %s133
      %p135 = scmp.eq.s32.totalorder %s34, 0
      %p136 = por %p134, %p135
      %s138 = sadd.s32 %s137, 1
      %p141 = scmp.eq.s32.totalorder %s28, 3
      %p142 = scmp.ne.s32.totalorder %s137, %s139
      %p143 = scmp.eq.s32.totalorder %s28, 0
      %p144 = por %p142, %p143
      %p145 = scmp.ne.s32.totalorder %s137, %s139
      %p146 = scmp.eq.s32.totalorder %s33, 3
      %p147 = por %p145, %p146
      %p148 = scmp.ne.s32.totalorder %s139, %s140
      %p149 = scmp.eq.s32.totalorder %s33, 0
      %p150 = por %p148, %p149
      %p151 = scmp.ne.s32.totalorder %s139, %s140
      %p152 = scmp.eq.s32.totalorder %s34, 3
      %p153 = por %p151, %p152
      %p155 = scmp.ne.s32.totalorder %s140, %s154
      %p156 = scmp.eq.s32.totalorder %s34, 0
      %p157 = por %p155, %p156
      %s159 = sadd.s32 %s158, 1
      %p162 = scmp.eq.s32.totalorder %s28, 3
      %p163 = scmp.ne.s32.totalorder %s158, %s160
      %p164 = scmp.eq.s32.totalorder %s28, 0
      %p165 = por %p163, %p164
      %p166 = scmp.ne.s32.totalorder %s158, %s160
      %p167 = scmp.eq.s32.totalorder %s33, 3
      %p168 = por %p166, %p167
      %p169 = scmp.ne.s32.totalorder %s160, %s161
      %p170 = scmp.eq.s32.totalorder %s33, 0
      %p171 = por %p169, %p170
      %p172 = scmp.ne.s32.totalorder %s160, %s161
      %p173 = scmp.eq.s32.totalorder %s34, 3
      %p174 = por %p172, %p173
      %p176 = scmp.ne.s32.totalorder %s161, %s175
      %p177 = scmp.eq.s32.totalorder %s34, 0
      %p178 = por %p176, %p177
      %s180 = sadd.s32 %s179, 1
      %p183 = scmp.eq.s32.totalorder %s28, 3
      %p184 = scmp.ne.s32.totalorder %s179, %s181
      %p185 = scmp.eq.s32.totalorder %s28, 0
      %p186 = por %p184, %p185
      %p187 = scmp.ne.s32.totalorder %s179, %s181
      %p188 = scmp.eq.s32.totalorder %s33, 3
      %p189 = por %p187, %p188
      %p190 = scmp.ne.s32.totalorder %s181, %s182
      %p191 = scmp.eq.s32.totalorder %s33, 0
      %p192 = por %p190, %p191
      %p193 = scmp.ne.s32.totalorder %s181, %s182
      %p194 = scmp.eq.s32.totalorder %s34, 3
      %p195 = por %p193, %p194
      %p197 = scmp.ne.s32.totalorder %s182, %s196
      %p198 = scmp.eq.s32.totalorder %s34, 0
      %p199 = por %p197, %p198
      %s201 = sadd.s32 %s200, 1
      %p204 = scmp.eq.s32.totalorder %s28, 3
      %p205 = scmp.ne.s32.totalorder %s200, %s202
      %p206 = scmp.eq.s32.totalorder %s28, 0
      %p207 = por %p205, %p206
      %p208 = scmp.ne.s32.totalorder %s200, %s202
      %p209 = scmp.eq.s32.totalorder %s33, 3
      %p210 = por %p208, %p209
      %p211 = scmp.ne.s32.totalorder %s202, %s203
      %p212 = scmp.eq.s32.totalorder %s33, 0
      %p213 = por %p211, %p212
      %p214 = scmp.ne.s32.totalorder %s202, %s203
      %p215 = scmp.eq.s32.totalorder %s34, 3
      %p216 = por %p214, %p215
      %p218 = scmp.ne.s32.totalorder %s203, %s217
      %p219 = scmp.eq.s32.totalorder %s34, 0
      %p220 = por %p218, %p219
      %s222 = sadd.s32 %s221, 1
      %p225 = scmp.eq.s32.totalorder %s28, 3
      %p226 = scmp.ne.s32.totalorder %s221, %s223
      %p227 = scmp.eq.s32.totalorder %s28, 0
      %p228 = por %p226, %p227
      %p229 = scmp.ne.s32.totalorder %s221, %s223
      %p230 = scmp.eq.s32.totalorder %s33, 3
      %p231 = por %p229, %p230
      %p232 = scmp.ne.s32.totalorder %s223, %s224
      %p233 = scmp.eq.s32.totalorder %s33, 0
      %p234 = por %p232, %p233
      %p235 = scmp.ne.s32.totalorder %s223, %s224
      %p236 = scmp.eq.s32.totalorder %s34, 3
      %p237 = por %p235, %p236
      %p239 = scmp.ne.s32.totalorder %s224, %s238
      %p240 = scmp.eq.s32.totalorder %s34, 0
      %p241 = por %p239, %p240
      %s243 = sadd.s32 %s242, 1
      %p246 = scmp.eq.s32.totalorder %s28, 3
      %p247 = scmp.ne.s32.totalorder %s242, %s244
      %p248 = scmp.eq.s32.totalorder %s28, 0
      %p249 = por %p247, %p248
      %p250 = scmp.ne.s32.totalorder %s242, %s244
      %p251 = scmp.eq.s32.totalorder %s33, 3
      %p252 = por %p250, %p251
      %p253 = scmp.ne.s32.totalorder %s244, %s245
      %p254 = scmp.eq.s32.totalorder %s33, 0
      %p255 = por %p253, %p254
      %p256 = scmp.ne.s32.totalorder %s244, %s245
      %p257 = scmp.eq.s32.totalorder %s34, 3
      %p258 = por %p256, %p257
      %p260 = scmp.ne.s32.totalorder %s245, %s259
      %p261 = scmp.eq.s32.totalorder %s34, 0
      %p262 = por %p260, %p261
      %s264 = sadd.s32 %s263, 1
      %p267 = scmp.eq.s32.totalorder %s28, 3
      %p268 = scmp.ne.s32.totalorder %s263, %s265
      %p269 = scmp.eq.s32.totalorder %s28, 0
      %p270 = por %p268, %p269
      %p271 = scmp.ne.s32.totalorder %s263, %s265
      %p272 = scmp.eq.s32.totalorder %s33, 3
      %p273 = por %p271, %p272
      %p274 = scmp.ne.s32.totalorder %s265, %s266
      %p275 = scmp.eq.s32.totalorder %s33, 0
      %p276 = por %p274, %p275
      %p277 = scmp.ne.s32.totalorder %s265, %s266
      %p278 = scmp.eq.s32.totalorder %s34, 3
      %p279 = por %p277, %p278
      %p281 = scmp.ne.s32.totalorder %s266, %s280
      %p282 = scmp.eq.s32.totalorder %s34, 0
      %p283 = por %p281, %p282
      %s285 = sadd.s32 %s284, 1
      %p288 = scmp.eq.s32.totalorder %s28, 3
      %p289 = scmp.ne.s32.totalorder %s284, %s286
      %p290 = scmp.eq.s32.totalorder %s28, 0
      %p291 = por %p289, %p290
      %p292 = scmp.ne.s32.totalorder %s284, %s286
      %p293 = scmp.eq.s32.totalorder %s33, 3
      %p294 = por %p292, %p293
      %p295 = scmp.ne.s32.totalorder %s286, %s287
      %p296 = scmp.eq.s32.totalorder %s33, 0
      %p297 = por %p295, %p296
      %p298 = scmp.ne.s32.totalorder %s286, %s287
      %p299 = scmp.eq.s32.totalorder %s34, 3
      %p300 = por %p298, %p299
      %p302 = scmp.ne.s32.totalorder %s287, %s301
      %p303 = scmp.eq.s32.totalorder %s34, 0
      %p304 = por %p302, %p303
      %s306 = sadd.s32 %s305, 1
      %p309 = scmp.eq.s32.totalorder %s28, 3
      %p310 = scmp.ne.s32.totalorder %s305, %s307
      %p311 = scmp.eq.s32.totalorder %s28, 0
      %p312 = por %p310, %p311
      %p313 = scmp.ne.s32.totalorder %s305, %s307
      %p314 = scmp.eq.s32.totalorder %s33, 3
      %p315 = por %p313, %p314
      %p316 = scmp.ne.s32.totalorder %s307, %s308
      %p317 = scmp.eq.s32.totalorder %s33, 0
      %p318 = por %p316, %p317
      %p319 = scmp.ne.s32.totalorder %s307, %s308
      %p320 = scmp.eq.s32.totalorder %s34, 3
      %p321 = por %p319, %p320
      %p323 = scmp.ne.s32.totalorder %s308, %s322
      %p324 = scmp.eq.s32.totalorder %s34, 0
      %p325 = por %p323, %p324
      %s327 = sadd.s32 %s326, 1
      %p330 = scmp.eq.s32.totalorder %s28, 3
      %p331 = scmp.ne.s32.totalorder %s326, %s328
      %p332 = scmp.eq.s32.totalorder %s28, 0
      %p333 = por %p331, %p332
      %p334 = scmp.ne.s32.totalorder %s326, %s328
      %p335 = scmp.eq.s32.totalorder %s33, 3
      %p336 = por %p334, %p335
      %p337 = scmp.ne.s32.totalorder %s328, %s329
      %p338 = scmp.eq.s32.totalorder %s33, 0
      %p339 = por %p337, %p338
      %p340 = scmp.ne.s32.totalorder %s328, %s329
      %p341 = scmp.eq.s32.totalorder %s34, 3
      %p342 = por %p340, %p341
      %p344 = scmp.ne.s32.totalorder %s329, %s343
      %p345 = scmp.eq.s32.totalorder %s34, 0
      %p346 = por %p344, %p345
      %s348 = sadd.s32 %s347, 1
      %p351 = scmp.eq.s32.totalorder %s28, 3
      %p352 = scmp.ne.s32.totalorder %s347, %s349
      %p353 = scmp.eq.s32.totalorder %s28, 0
      %p354 = por %p352, %p353
      %p355 = scmp.ne.s32.totalorder %s347, %s349
      %p356 = scmp.eq.s32.totalorder %s33, 3
      %p357 = por %p355, %p356
      %p358 = scmp.ne.s32.totalorder %s349, %s350
      %p359 = scmp.eq.s32.totalorder %s33, 0
      %p360 = por %p358, %p359
      %p361 = scmp.ne.s32.totalorder %s349, %s350
      %p362 = scmp.eq.s32.totalorder %s34, 3
      %p363 = por %p361, %p362
      %p365 = scmp.ne.s32.totalorder %s350, %s364
      %p366 = scmp.eq.s32.totalorder %s34, 0
      %p367 = por %p365, %p366
      %s369 = sadd.s32 %s368, 1
      %p372 = scmp.eq.s32.totalorder %s28, 3
      %p373 = scmp.ne.s32.totalorder %s368, %s370
      %p374 = scmp.eq.s32.totalorder %s28, 0
      %p375 = por %p373, %p374
      %p376 = scmp.ne.s32.totalorder %s368, %s370
      %p377 = scmp.eq.s32.totalorder %s33, 3
      %p378 = por %p376, %p377
      %p379 = scmp.ne.s32.totalorder %s370, %s371
      %p380 = scmp.eq.s32.totalorder %s33, 0
      %p381 = por %p379, %p380
      %p382 = scmp.ne.s32.totalorder %s370, %s371
      %p383 = scmp.eq.s32.totalorder %s34, 3
      %p384 = por %p382, %p383
      %p386 = scmp.ne.s32.totalorder %s371, %s385
      %p387 = scmp.eq.s32.totalorder %s34, 0
      %p388 = por %p386, %p387
      %s390 = sadd.s32 %s389, 1
      %p393 = scmp.eq.s32.totalorder %s28, 3
      %p394 = scmp.ne.s32.totalorder %s389, %s391
      %p395 = scmp.eq.s32.totalorder %s28, 0
      %p396 = por %p394, %p395
      %p397 = scmp.ne.s32.totalorder %s389, %s391
      %p398 = scmp.eq.s32.totalorder %s33, 3
      %p399 = por %p397, %p398
      %p400 = scmp.ne.s32.totalorder %s391, %s392
      %p401 = scmp.eq.s32.totalorder %s33, 0
      %p402 = por %p400, %p401
      %p403 = scmp.ne.s32.totalorder %s391, %s392
      %p404 = scmp.eq.s32.totalorder %s34, 3
      %p405 = por %p403, %p404
      %p407 = scmp.ne.s32.totalorder %s392, %s406
      %p408 = scmp.eq.s32.totalorder %s34, 0
      %p409 = por %p407, %p408
      %s410 = ssub.s32 %s35, %s47
      %s411 = ssub.s32 %s36, %s43
      %s412 = sor.u32 %s410, %s411
      %p413 = scmp.eq.s32.totalorder %s412, 0
      %s415 = sadd.s32 %s414, 1
      %s416 = scalar_select %p413, %s414, %s415
      %p419 = pneg %p413
      %p420 = scmp.eq.s32.totalorder %s28, 3
      %p421 = por %p419, %p420
      %p422 = scmp.ne.s32.totalorder %s414, %s417
      %p423 = scmp.eq.s32.totalorder %s28, 0
      %p424 = por %p422, %p423
      %p425 = scmp.ne.s32.totalorder %s414, %s417
      %p426 = scmp.eq.s32.totalorder %s33, 3
      %p427 = por %p425, %p426
      %p428 = scmp.ne.s32.totalorder %s417, %s418
      %p429 = scmp.eq.s32.totalorder %s33, 0
      %p430 = por %p428, %p429
      %p431 = scmp.ne.s32.totalorder %s417, %s418
      %p432 = scmp.eq.s32.totalorder %s34, 3
      %p433 = por %p431, %p432
      %p435 = scmp.ne.s32.totalorder %s418, %s434
      %p436 = scmp.eq.s32.totalorder %s34, 0
      %p437 = por %p435, %p436
      %p438 = scmp.le.s32.totalorder 1, %s28
      %p439 = scmp.lt.s32.totalorder %s28, 5
      %p440 = pnand %p438, %p439
      %p441 = pneg %p440
      // Predicated region
      $region9: #{tpu_custom_call.1} parent=5 // pred_check
        _
      $region10: #{tpu_custom_call.1} parent=5 // pred_check_branch
        %443 = sbr.rel (%p440) target = $region12
      $region11: #{tpu_custom_call.1} parent=5 // pred_region
        %s444 = ssub.s32 %s28, 1
        // Predicated region
        $region13: #{tpu_custom_call.1} parent=11 // pred_check
          %p445 = pneg %p87
        $region14: #{tpu_custom_call.1} parent=11 // pred_check_branch
          %447 = sbr.rel (%p445) target = $region16
        $region15: #{tpu_custom_call.1} parent=11 // pred_region
          _
        $region16: #{tpu_custom_call.1} parent=11 // pred_fallthru
          _
        // Predicated region
        $region17: #{tpu_custom_call.1} parent=11 // pred_check
          %p448 = pneg %p108
        $region18: #{tpu_custom_call.1} parent=11 // pred_check_branch
          %450 = sbr.rel (%p448) target = $region20
        $region19: #{tpu_custom_call.1} parent=11 // pred_region
          _
        $region20: #{tpu_custom_call.1} parent=11 // pred_fallthru
          _
        // Predicated region
        $region21: #{tpu_custom_call.1} parent=11 // pred_check
          %p451 = pneg %p129
        $region22: #{tpu_custom_call.1} parent=11 // pred_check_branch
          %453 = sbr.rel (%p451) target = $region24
        $region23: #{tpu_custom_call.1} parent=11 // pred_region
          _
        $region24: #{tpu_custom_call.1} parent=11 // pred_fallthru
          _
        // Predicated region
        $region25: #{tpu_custom_call.1} parent=11 // pred_check
          %p454 = pneg %p150
        $region26: #{tpu_custom_call.1} parent=11 // pred_check_branch
          %456 = sbr.rel (%p454) target = $region28
        $region27: #{tpu_custom_call.1} parent=11 // pred_region
          _
        $region28: #{tpu_custom_call.1} parent=11 // pred_fallthru
          _
        // Predicated region
        $region29: #{tpu_custom_call.1} parent=11 // pred_check
          %p457 = pneg %p171
        $region30: #{tpu_custom_call.1} parent=11 // pred_check_branch
          %459 = sbr.rel (%p457) target = $region32
        $region31: #{tpu_custom_call.1} parent=11 // pred_region
          %461 = vsyncadd [#allocation5], 0
          %s462 = sshll.u32 %s5, 4
          %s463 = int_to_ptr.hbm [resolvable:$true] %s462
          %s464 = sshll.u32 [#allocation4], 4
          %s465 = int_to_ptr.vmem [resolvable:$true] %s464
          %470 = dma.hbm_to_vmem [thread:$0]  %s463, 512, %s465, [#allocation5], 128, 128, 8
        $region32: #{tpu_custom_call.1} parent=11 // pred_fallthru
          _
        // Predicated region
        $region33: #{tpu_custom_call.1} parent=11 // pred_check
          %p471 = pneg %p192
        $region34: #{tpu_custom_call.1} parent=11 // pred_check_branch
          %473 = sbr.rel (%p471) target = $region36
        $region35: #{tpu_custom_call.1} parent=11 // pred_region
          _
        $region36: #{tpu_custom_call.1} parent=11 // pred_fallthru
          _
        // Predicated region
        $region37: #{tpu_custom_call.1} parent=11 // pred_check
          %p474 = pneg %p213
        $region38: #{tpu_custom_call.1} parent=11 // pred_check_branch
          %476 = sbr.rel (%p474) target = $region40
        $region39: #{tpu_custom_call.1} parent=11 // pred_region
          %478 = vsyncadd [#allocation8], 0
          %s479 = sshll.u32 %s7, 4
          %s480 = int_to_ptr.hbm [resolvable:$true] %s479
          %s481 = sshll.u32 [#allocation7], 4
          %s482 = int_to_ptr.vmem [resolvable:$true] %s481
          %487 = dma.hbm_to_vmem [thread:$0]  %s480, 512, %s482, [#allocation8], 128, 128, 8
        $region40: #{tpu_custom_call.1} parent=11 // pred_fallthru
          _
        // Predicated region
        $region41: #{tpu_custom_call.1} parent=11 // pred_check
          %p488 = pneg %p234
        $region42: #{tpu_custom_call.1} parent=11 // pred_check_branch
          %490 = sbr.rel (%p488) target = $region44
        $region43: #{tpu_custom_call.1} parent=11 // pred_region
          _
        $region44: #{tpu_custom_call.1} parent=11 // pred_fallthru
          _
        // Predicated region
        $region45: #{tpu_custom_call.1} parent=11 // pred_check
          %p491 = pneg %p255
        $region46: #{tpu_custom_call.1} parent=11 // pred_check_branch
          %493 = sbr.rel (%p491) target = $region48
        $region47: #{tpu_custom_call.1} parent=11 // pred_region
          _
        $region48: #{tpu_custom_call.1} parent=11 // pred_fallthru
          _
        // Predicated region
        $region49: #{tpu_custom_call.1} parent=11 // pred_check
          %p494 = pneg %p276
        $region50: #{tpu_custom_call.1} parent=11 // pred_check_branch
          %496 = sbr.rel (%p494) target = $region52
        $region51: #{tpu_custom_call.1} parent=11 // pred_region
          _
        $region52: #{tpu_custom_call.1} parent=11 // pred_fallthru
          _
        // Predicated region
        $region53: #{tpu_custom_call.1} parent=11 // pred_check
          %p497 = pneg %p297
        $region54: #{tpu_custom_call.1} parent=11 // pred_check_branch
          %499 = sbr.rel (%p497) target = $region56
        $region55: #{tpu_custom_call.1} parent=11 // pred_region
          %501 = vsyncadd [#allocation8], 0
          %s502 = sshll.u32 %s11, 4
          %s503 = int_to_ptr.hbm [resolvable:$true] %s502
          %s504 = sshll.u32 [#allocation9], 4
          %s505 = int_to_ptr.vmem [resolvable:$true] %s504
          %510 = dma.hbm_to_vmem [thread:$0]  %s503, 512, %s505, [#allocation8], 128, 128, 8
        $region56: #{tpu_custom_call.1} parent=11 // pred_fallthru
          _
        // Predicated region
        $region57: #{tpu_custom_call.1} parent=11 // pred_check
          %p511 = pneg %p318
        $region58: #{tpu_custom_call.1} parent=11 // pred_check_branch
          %513 = sbr.rel (%p511) target = $region60
        $region59: #{tpu_custom_call.1} parent=11 // pred_region
          _
        $region60: #{tpu_custom_call.1} parent=11 // pred_fallthru
          _
        // Predicated region
        $region61: #{tpu_custom_call.1} parent=11 // pred_check
          %p514 = pneg %p339
        $region62: #{tpu_custom_call.1} parent=11 // pred_check_branch
          %516 = sbr.rel (%p514) target = $region64
        $region63: #{tpu_custom_call.1} parent=11 // pred_region
          _
        $region64: #{tpu_custom_call.1} parent=11 // pred_fallthru
          _
        // Predicated region
        $region65: #{tpu_custom_call.1} parent=11 // pred_check
          %p517 = pneg %p360
        $region66: #{tpu_custom_call.1} parent=11 // pred_check_branch
          %519 = sbr.rel (%p517) target = $region68
        $region67: #{tpu_custom_call.1} parent=11 // pred_region
          _
        $region68: #{tpu_custom_call.1} parent=11 // pred_fallthru
          _
        // Predicated region
        $region69: #{tpu_custom_call.1} parent=11 // pred_check
          %p520 = pneg %p381
        $region70: #{tpu_custom_call.1} parent=11 // pred_check_branch
          %522 = sbr.rel (%p520) target = $region72
        $region71: #{tpu_custom_call.1} parent=11 // pred_region
          _
        $region72: #{tpu_custom_call.1} parent=11 // pred_fallthru
          _
        // Predicated region
        $region73: #{tpu_custom_call.1} parent=11 // pred_check
          %p523 = pneg %p402
        $region74: #{tpu_custom_call.1} parent=11 // pred_check_branch
          %525 = sbr.rel (%p523) target = $region76
        $region75: #{tpu_custom_call.1} parent=11 // pred_region
          _
        $region76: #{tpu_custom_call.1} parent=11 // pred_fallthru
          _
      $region12: #{tpu_custom_call.1} parent=5 // pred_fallthru
        _
      %p526 = scmp.lt.s32.totalorder %s28, 4
      // Predicated region
      $region77: #{tpu_custom_call.1} parent=5 // pred_check
        %p527 = pneg %p526
      $region78: #{tpu_custom_call.1} parent=5 // pred_check_branch
        %529 = sbr.rel (%p527) target = $region80
      $region79: #{tpu_custom_call.1} parent=5 // pred_region
        // Predicated region
        $region81: #{tpu_custom_call.1} parent=79 // pred_check
          %p530 = pneg %p60
        $region82: #{tpu_custom_call.1} parent=79 // pred_check_branch
          %532 = sbr.rel (%p530) target = $region84
        $region83: #{tpu_custom_call.1} parent=79 // pred_region
          %p533 = scmp.lt.s32.totalorder %s35, 1
          %s534 = scalar_select %p533, %s35, 1
          %s535 = smul.addr %s534, 2
          %s536 = smul.addr %s535, 8
          %s537 = scalar_lea.vmem %s0, %s536
        $region84: #{tpu_custom_call.1} parent=79 // pred_fallthru
          _
      $region80: #{tpu_custom_call.1} parent=5 // pred_fallthru
        _
      %p538 = scmp.le.s32.totalorder 1, %s28
      %p539 = scmp.lt.s32.totalorder %s28, 5
      %p540 = pnand %p538, %p539
      %p541 = pneg %p540
      // Predicated region
      $region85: #{tpu_custom_call.1} parent=5 // pred_check
        _
      $region86: #{tpu_custom_call.1} parent=5 // pred_check_branch
        %543 = sbr.rel (%p540) target = $region88
      $region87: #{tpu_custom_call.1} parent=5 // pred_region
        %s544 = ssub.s32 %s28, 1
        // Predicated region
        $region89: #{tpu_custom_call.1} parent=87 // pred_check
          %p545 = pneg %p171
        $region90: #{tpu_custom_call.1} parent=87 // pred_check_branch
          %547 = sbr.rel (%p545) target = $region92
        $region91: #{tpu_custom_call.1} parent=87 // pred_region
          %549 = dma.done [#allocation5], 512
        $region92: #{tpu_custom_call.1} parent=87 // pred_fallthru
          _
        // Predicated region
        $region93: #{tpu_custom_call.1} parent=87 // pred_check
          %p550 = pneg %p213
        $region94: #{tpu_custom_call.1} parent=87 // pred_check_branch
          %552 = sbr.rel (%p550) target = $region96
        $region95: #{tpu_custom_call.1} parent=87 // pred_region
          %554 = dma.done [#allocation8], 512
        $region96: #{tpu_custom_call.1} parent=87 // pred_fallthru
          _
        // Predicated region
        $region97: #{tpu_custom_call.1} parent=87 // pred_check
          %p555 = pneg %p297
        $region98: #{tpu_custom_call.1} parent=87 // pred_check_branch
          %557 = sbr.rel (%p555) target = $region100
        $region99: #{tpu_custom_call.1} parent=87 // pred_region
          %559 = dma.done [#allocation8], 512
        $region100: #{tpu_custom_call.1} parent=87 // pred_fallthru
          _
        %p560 = scmp.lt.s32.totalorder %s37, 1
        %s561 = scalar_select %p560, %s37, 1
        %s562 = smul.addr %s561, 2
        %s563 = smul.addr %s562, 8
        %s564 = scalar_lea.vmem %s0, %s563
        %p565 = pneg %p66
        %p566 = pneg %p63
        %p567 = pneg %p87
        %p568 = pneg %p84
        %p569 = pneg %p108
        %p570 = pneg %p105
        %p571 = pneg %p129
        %p572 = pneg %p126
        %p573 = pneg %p150
        %p574 = pneg %p147
        %p575 = pneg %p171
        %p576 = pneg %p168
        %p577 = pneg %p192
        %p578 = pneg %p189
        %p579 = pneg %p213
        %p580 = pneg %p210
        %p581 = pneg %p234
        %p582 = pneg %p231
        %p583 = pneg %p255
        %p584 = pneg %p252
        %p585 = pneg %p276
        %p586 = pneg %p273
        %p587 = pneg %p297
        %p588 = pneg %p294
        %p589 = pneg %p318
        %p590 = pneg %p315
        %p591 = pneg %p339
        %p592 = pneg %p336
        %p593 = pneg %p360
        %p594 = pneg %p357
        %p595 = pneg %p381
        %p596 = pneg %p378
        %p597 = pneg %p402
        %p598 = pneg %p399
        %p599 = pneg %p430
        %p600 = pneg %p427
        %s601 = sand.u32 %s417, 1
        %s602 = scalar_lea.sflag [#allocation6], %s601
        %s603 = sand.u32 %s417, 1
        %s604 = smul.addr %s603, 8
        %s605 = scalar_lea.vmem [#allocation10], %s604
        %p606 = scmp.lt.s32.totalorder %s37, 1
        %s607 = scalar_select %p606, %s37, 1
        %s608 = smul.addr %s607, 2
        %s609 = smul.addr %s608, 8
        %s610 = scalar_lea.vmem %s0, %s609
        %p611 = scmp.eq.s32.totalorder %s38, 0
        // Predicated region
        $region101: #{tpu_custom_call.1} parent=87 // pred_check
          %p612 = pneg %p611
        $region102: #{tpu_custom_call.1} parent=87 // pred_check_branch
          %614 = sbr.rel (%p612) target = $region104
        $region103: #{tpu_custom_call.1} parent=87 // pred_region
          loop: start=0, step=1, limit=2
          $region105: #{tpu_custom_call.1} parent=103 // loop_pre_header
            _
          $region106: #{tpu_custom_call.1} parent=103 // loop_header
            %s616 = sphi 0, %s620
            %p617 = scmp.ge.s32.totalorder %s616, 2
          $region107: #{tpu_custom_call.1} parent=103 // loop_header_branch
            %619 = sbr.rel (%p617) target = $region111
          $region108: #{tpu_custom_call.1} parent=103 // loop_body
            %s621 = smul.u32 %s616, 8
            %s622 = scalar_lea.vmem %s610, %s621
            %v623 = vld [vmem:[%s622] sm:$0xff]
            %v624 = vld [vmem:[%s3] sm:$0xff]
            %v625 = vld [vmem:[%s3 + $0x8] sm:$0xff]
            %v626 = vld [vmem:[%s3 + $0x10] sm:$0xff]
            %v627 = vld [vmem:[%s3 + $0x18] sm:$0xff]
            %v628 = vld [vmem:[%s4] sm:$0x1]
            %v630 = vperm.slane %v628, 0
            %vm632 = vcmask 261120
            %v634 = vsel %vm632, %v623, 0
            %636 = vmatpush.msra.mxu0 0.0
            %637 = vmatpush.msra.mxu0 0.0
            %638 = vmatpush.msra.mxu0 0.0
            %639 = vmatpush.msra.mxu0 0.0
            %640 = vmatpush.msra.mxu0 0.0
            %641 = vmatpush.msra.mxu0 0.0
            %642 = vmatpush.msra.mxu0 0.0
            %643 = vmatpush.msra.mxu0 0.0
            %644 = vmatpush.msra.mxu0 0.0
            %645 = vmatpush.msra.mxu0 0.0
            %646 = vmatpush.msra.mxu0 0.0
            %647 = vmatpush.msra.mxu0 0.0
            %648 = vmatpush.msra.mxu0 %v627
            %649 = vmatpush.msra.mxu0 %v626
            %650 = vmatpush.msra.mxu0 %v625
            %651 = vmatpush.msra.mxu0 %v624
            %652 = vmatmul.f32.gmra.mxu0 %v634
            %v653 = vpop.f32.mrf.mxu0
            %v654 = vadd.f32 %v630, %v653
            %655 = vdwg.mxu0
            %v656 = vld [vmem:[#allocation4] sm:$0xff]
            %v657 = vld [vmem:[#allocation4 + $0x8] sm:$0xff]
            %v658 = vld [vmem:[#allocation4 + $0x10] sm:$0xff]
            %v659 = vld [vmem:[#allocation4 + $0x18] sm:$0xff]
            %v660 = vld [vmem:[%s6] sm:$0x1]
            %v662 = vperm.slane %v660, 0
            %664 = vmatpush.msra.mxu0 0.0
            %665 = vmatpush.msra.mxu0 0.0
            %666 = vmatpush.msra.mxu0 0.0
            %667 = vmatpush.msra.mxu0 0.0
            %668 = vmatpush.msra.mxu0 0.0
            %669 = vmatpush.msra.mxu0 0.0
            %670 = vmatpush.msra.mxu0 0.0
            %671 = vmatpush.msra.mxu0 0.0
            %672 = vmatpush.msra.mxu0 0.0
            %673 = vmatpush.msra.mxu0 0.0
            %674 = vmatpush.msra.mxu0 0.0
            %675 = vmatpush.msra.mxu0 0.0
            %676 = vmatpush.msra.mxu0 %v659
            %677 = vmatpush.msra.mxu0 %v658
            %678 = vmatpush.msra.mxu0 %v657
            %679 = vmatpush.msra.mxu0 %v656
            %680 = vmatmul.f32.gmra.mxu0 %v634
            %v681 = vpop.f32.mrf.mxu0
            %v682 = vadd.f32 %v662, %v681
            %683 = vdwg.mxu0
            %685 = vrot.lane.b32.xlu0 %v654, 120
            %v686 = vpop.permute.xlu0 %685
            %688 = vrot.lane.b32.xlu0 %v654, 112
            %v689 = vpop.permute.xlu0 %688
            %691 = vrot.lane.b32.xlu0 %v654, 104
            %v692 = vpop.permute.xlu0 %691
            %v694 = vrot.slane %v689, 4
            %vm695 = vcmask 1047556
            %v696 = vsel %vm695, %v694, %v654
            %v697 = vrot.slane %v654, 4
            %v698 = vsel %vm695, %v689, %v697
            %v700 = vunpack.c.l.s4 1983009808
            %v701 = vunpack.c.0.s8 %v700
            %v702 = vperm.slane %v696, %v701
            %v704 = vunpack.c.l.s4 1983009808
            %v705 = vunpack.c.0.s8 %v704
            %v706 = vperm.slane %v698, %v705
            %v707 = vrot.slane %v692, 4
            %v708 = vsel %vm695, %v707, %v686
            %v709 = vrot.slane %v686, 4
            %v710 = vsel %vm695, %v692, %v709
            %v712 = vunpack.c.l.s4 1983009808
            %v713 = vunpack.c.0.s8 %v712
            %v714 = vperm.slane %v708, %v713
            %v716 = vunpack.c.l.s4 1983009808
            %v717 = vunpack.c.0.s8 %v716
            %v718 = vperm.slane %v710, %v717
            %v719 = vrot.slane %v714, 4
            %v720 = vsel %vm695, %v719, %v702
            %v721 = vrot.slane %v702, 4
            %v722 = vsel %vm695, %v714, %v721
            %v724 = vunpack.c.l.s4 1934713408
            %v725 = vunpack.c.0.s8 %v724
            %v726 = vperm.slane %v720, %v725
            %v728 = vunpack.c.l.s4 1934713408
            %v729 = vunpack.c.0.s8 %v728
            %v730 = vperm.slane %v722, %v729
            %v731 = vrot.slane %v718, 4
            %v732 = vsel %vm695, %v731, %v706
            %v733 = vrot.slane %v706, 4
            %v734 = vsel %vm695, %v718, %v733
            %v736 = vunpack.c.l.s4 1934713408
            %v737 = vunpack.c.0.s8 %v736
            %v738 = vperm.slane %v732, %v737
            %v740 = vunpack.c.l.s4 1934713408
            %v741 = vunpack.c.0.s8 %v740
            %v742 = vperm.slane %v734, %v741
            %v743 = vrot.slane %v726, 4
            %v744 = vsel %vm695, 0.0, %v743
            %v745 = vrot.slane %v730, 4
            %v746 = vsel %vm695, 0.0, %v745
            %v747 = vrot.slane %v738, 4
            %v748 = vsel %vm695, 0.0, %v747
            %v749 = vrot.slane %v742, 4
            %v750 = vsel %vm695, 0.0, %v749
            %v751 = vsel %vm695, %v745, %v726
            %v753 = vunpack.c.l.s4 1983009808
            %v754 = vunpack.c.0.s8 %v753
            %v755 = vperm.slane %v751, %v754
            %v756 = vrot.slane %v746, 4
            %v757 = vsel %vm695, %v756, %v744
            %v759 = vunpack.c.l.s4 1983009808
            %v760 = vunpack.c.0.s8 %v759
            %v761 = vperm.slane %v757, %v760
            %v762 = vsel %vm695, %v749, %v738
            %v764 = vunpack.c.l.s4 1983009808
            %v765 = vunpack.c.0.s8 %v764
            %v766 = vperm.slane %v762, %v765
            %v767 = vrot.slane %v750, 4
            %v768 = vsel %vm695, %v767, %v748
            %v770 = vunpack.c.l.s4 1983009808
            %v771 = vunpack.c.0.s8 %v770
            %v772 = vperm.slane %v768, %v771
            %v773 = vrot.slane %v761, 4
            %v774 = vsel %vm695, %v773, %v755
            %v775 = vrot.slane %v755, 4
            %v776 = vsel %vm695, %v761, %v775
            %v778 = vunpack.c.l.s4 1934713408
            %v779 = vunpack.c.0.s8 %v778
            %v780 = vperm.slane %v774, %v779
            %v782 = vunpack.c.l.s4 1934713408
            %v783 = vunpack.c.0.s8 %v782
            %v784 = vperm.slane %v776, %v783
            %v785 = vrot.slane %v772, 4
            %v786 = vsel %vm695, %v785, %v766
            %v787 = vrot.slane %v766, 4
            %v788 = vsel %vm695, %v772, %v787
            %v790 = vunpack.c.l.s4 1934713408
            %v791 = vunpack.c.0.s8 %v790
            %v792 = vperm.slane %v786, %v791
            %v794 = vunpack.c.l.s4 1934713408
            %v795 = vunpack.c.0.s8 %v794
            %v796 = vperm.slane %v788, %v795
            %v797 = vrot.slane %v792, 4
            %v798 = vsel %vm695, %v797, %v780
            %v799 = vrot.slane %v780, 4
            %v800 = vsel %vm695, %v792, %v799
            %v801 = vrot.slane %v796, 4
            %v802 = vsel %vm695, %v801, %v784
            %v803 = vrot.slane %v784, 4
            %v804 = vsel %vm695, %v796, %v803
            %s805 = scalar_lea.vmem [#allocation2], %s621
            %vm806 = vcmask 64512
            %807 = vst.msk [vmem:[%s805] sm:$0xff] %vm806, %v798
            %808 = vst.msk [vmem:[%s805 + $0x10] sm:$0xff] %vm806, %v800
            %809 = vst.msk [vmem:[%s805 + $0x20] sm:$0xff] %vm806, %v802
            %810 = vst.msk [vmem:[%s805 + $0x30] sm:$0xff] %vm806, %v804
            %812 = vrot.lane.b32.xlu0 %v682, 120
            %v813 = vpop.permute.xlu0 %812
            %815 = vrot.lane.b32.xlu0 %v682, 112
            %v816 = vpop.permute.xlu0 %815
            %818 = vrot.lane.b32.xlu0 %v682, 104
            %v819 = vpop.permute.xlu0 %818
            %v821 = vrot.slane %v816, 4
            %v822 = vsel %vm695, %v821, %v682
            %v823 = vrot.slane %v682, 4
            %v824 = vsel %vm695, %v816, %v823
            %v826 = vunpack.c.l.s4 1983009808
            %v827 = vunpack.c.0.s8 %v826
            %v828 = vperm.slane %v822, %v827
            %v830 = vunpack.c.l.s4 1983009808
            %v831 = vunpack.c.0.s8 %v830
            %v832 = vperm.slane %v824, %v831
            %v833 = vrot.slane %v819, 4
            %v834 = vsel %vm695, %v833, %v813
            %v835 = vrot.slane %v813, 4
            %v836 = vsel %vm695, %v819, %v835
            %v838 = vunpack.c.l.s4 1983009808
            %v839 = vunpack.c.0.s8 %v838
            %v840 = vperm.slane %v834, %v839
            %v842 = vunpack.c.l.s4 1983009808
            %v843 = vunpack.c.0.s8 %v842
            %v844 = vperm.slane %v836, %v843
            %v845 = vrot.slane %v840, 4
            %v846 = vsel %vm695, %v845, %v828
            %v847 = vrot.slane %v828, 4
            %v848 = vsel %vm695, %v840, %v847
            %v850 = vunpack.c.l.s4 1934713408
            %v851 = vunpack.c.0.s8 %v850
            %v852 = vperm.slane %v846, %v851
            %v854 = vunpack.c.l.s4 1934713408
            %v855 = vunpack.c.0.s8 %v854
            %v856 = vperm.slane %v848, %v855
            %v857 = vrot.slane %v844, 4
            %v858 = vsel %vm695, %v857, %v832
            %v859 = vrot.slane %v832, 4
            %v860 = vsel %vm695, %v844, %v859
            %v862 = vunpack.c.l.s4 1934713408
            %v863 = vunpack.c.0.s8 %v862
            %v864 = vperm.slane %v858, %v863
            %v866 = vunpack.c.l.s4 1934713408
            %v867 = vunpack.c.0.s8 %v866
            %v868 = vperm.slane %v860, %v867
            %v869 = vrot.slane %v852, 4
            %v870 = vsel %vm695, 0.0, %v869
            %v871 = vrot.slane %v856, 4
            %v872 = vsel %vm695, 0.0, %v871
            %v873 = vrot.slane %v864, 4
            %v874 = vsel %vm695, 0.0, %v873
            %v875 = vrot.slane %v868, 4
            %v876 = vsel %vm695, 0.0, %v875
            %v877 = vsel %vm695, %v871, %v852
            %v879 = vunpack.c.l.s4 1983009808
            %v880 = vunpack.c.0.s8 %v879
            %v881 = vperm.slane %v877, %v880
            %v882 = vrot.slane %v872, 4
            %v883 = vsel %vm695, %v882, %v870
            %v885 = vunpack.c.l.s4 1983009808
            %v886 = vunpack.c.0.s8 %v885
            %v887 = vperm.slane %v883, %v886
            %v888 = vsel %vm695, %v875, %v864
            %v890 = vunpack.c.l.s4 1983009808
            %v891 = vunpack.c.0.s8 %v890
            %v892 = vperm.slane %v888, %v891
            %v893 = vrot.slane %v876, 4
            %v894 = vsel %vm695, %v893, %v874
            %v896 = vunpack.c.l.s4 1983009808
            %v897 = vunpack.c.0.s8 %v896
            %v898 = vperm.slane %v894, %v897
            %v899 = vrot.slane %v887, 4
            %v900 = vsel %vm695, %v899, %v881
            %v901 = vrot.slane %v881, 4
            %v902 = vsel %vm695, %v887, %v901
            %v904 = vunpack.c.l.s4 1934713408
            %v905 = vunpack.c.0.s8 %v904
            %v906 = vperm.slane %v900, %v905
            %v908 = vunpack.c.l.s4 1934713408
            %v909 = vunpack.c.0.s8 %v908
            %v910 = vperm.slane %v902, %v909
            %v911 = vrot.slane %v898, 4
            %v912 = vsel %vm695, %v911, %v892
            %v913 = vrot.slane %v892, 4
            %v914 = vsel %vm695, %v898, %v913
            %v916 = vunpack.c.l.s4 1934713408
            %v917 = vunpack.c.0.s8 %v916
            %v918 = vperm.slane %v912, %v917
            %v920 = vunpack.c.l.s4 1934713408
            %v921 = vunpack.c.0.s8 %v920
            %v922 = vperm.slane %v914, %v921
            %v923 = vrot.slane %v918, 4
            %v924 = vsel %vm695, %v923, %v906
            %v925 = vrot.slane %v906, 4
            %v926 = vsel %vm695, %v918, %v925
            %v927 = vrot.slane %v922, 4
            %v928 = vsel %vm695, %v927, %v910
            %v929 = vrot.slane %v910, 4
            %v930 = vsel %vm695, %v922, %v929
            %s931 = scalar_lea.vmem [#allocation3], %s621
            %932 = vst.msk [vmem:[%s931] sm:$0xff] %vm806, %v924
            %933 = vst.msk [vmem:[%s931 + $0x10] sm:$0xff] %vm806, %v926
            %934 = vst.msk [vmem:[%s931 + $0x20] sm:$0xff] %vm806, %v928
            %935 = vst.msk [vmem:[%s931 + $0x30] sm:$0xff] %vm806, %v930
          $region109: #{tpu_custom_call.1} parent=103 // loop_footer
            %s620 = sadd.s32 1, %s616
          $region110: #{tpu_custom_call.1} parent=103 // loop_footer_branch
            %615 = sbr.rel target = $region106
          $region111: #{tpu_custom_call.1} parent=103 // loop_exit
            _
        $region104: #{tpu_custom_call.1} parent=87 // pred_fallthru
          _
        %s936 = smul.u32 %s38, 8
        %s937 = scalar_lea.vmem %s610, %s936
        %v938 = vld [vmem:[%s937] sm:$0xff]
        %v939 = vld [vmem:[%s1] sm:$0xff]
        %v940 = vld [vmem:[%s1 + $0x8] sm:$0xff]
        %v941 = vld [vmem:[%s1 + $0x10] sm:$0xff]
        %v942 = vld [vmem:[%s1 + $0x18] sm:$0xff]
        %v943 = vld [vmem:[%s2] sm:$0x1]
        %v945 = vperm.slane %v943, 0
        %vm947 = vcmask 261120
        %v949 = vsel %vm947, %v938, 0
        %951 = vmatpush.msra.mxu0 0.0
        %952 = vmatpush.msra.mxu0 0.0
        %953 = vmatpush.msra.mxu0 0.0
        %954 = vmatpush.msra.mxu0 0.0
        %955 = vmatpush.msra.mxu0 0.0
        %956 = vmatpush.msra.mxu0 0.0
        %957 = vmatpush.msra.mxu0 0.0
        %958 = vmatpush.msra.mxu0 0.0
        %959 = vmatpush.msra.mxu0 0.0
        %960 = vmatpush.msra.mxu0 0.0
        %961 = vmatpush.msra.mxu0 0.0
        %962 = vmatpush.msra.mxu0 0.0
        %963 = vmatpush.msra.mxu0 %v942
        %964 = vmatpush.msra.mxu0 %v941
        %965 = vmatpush.msra.mxu0 %v940
        %966 = vmatpush.msra.mxu0 %v939
        %967 = vmatmul.f32.gmra.mxu0 %v949
        %v968 = vpop.f32.mrf.mxu0
        %v969 = vadd.f32 %v945, %v968
        %970 = vdwg.mxu0
        %v971 = vmul.f32 %v969, 0.35355338
        %973 = vrot.lane.b32.xlu0 %v971, 120
        %v974 = vpop.permute.xlu0 %973
        %976 = vrot.lane.b32.xlu0 %v971, 112
        %v977 = vpop.permute.xlu0 %976
        %979 = vrot.lane.b32.xlu0 %v971, 104
        %v980 = vpop.permute.xlu0 %979
        %v982 = vrot.slane %v977, 4
        %vm983 = vcmask 1047556
        %v984 = vsel %vm983, %v982, %v971
        %v985 = vrot.slane %v971, 4
        %v986 = vsel %vm983, %v977, %v985
        %v988 = vunpack.c.l.s4 1983009808
        %v989 = vunpack.c.0.s8 %v988
        %v990 = vperm.slane %v984, %v989
        %v992 = vunpack.c.l.s4 1983009808
        %v993 = vunpack.c.0.s8 %v992
        %v994 = vperm.slane %v986, %v993
        %v995 = vrot.slane %v980, 4
        %v996 = vsel %vm983, %v995, %v974
        %v997 = vrot.slane %v974, 4
        %v998 = vsel %vm983, %v980, %v997
        %v1000 = vunpack.c.l.s4 1983009808
        %v1001 = vunpack.c.0.s8 %v1000
        %v1002 = vperm.slane %v996, %v1001
        %v1004 = vunpack.c.l.s4 1983009808
        %v1005 = vunpack.c.0.s8 %v1004
        %v1006 = vperm.slane %v998, %v1005
        %v1007 = vrot.slane %v1002, 4
        %v1008 = vsel %vm983, %v1007, %v990
        %v1009 = vrot.slane %v990, 4
        %v1010 = vsel %vm983, %v1002, %v1009
        %v1012 = vunpack.c.l.s4 1934713408
        %v1013 = vunpack.c.0.s8 %v1012
        %v1014 = vperm.slane %v1008, %v1013
        %v1016 = vunpack.c.l.s4 1934713408
        %v1017 = vunpack.c.0.s8 %v1016
        %v1018 = vperm.slane %v1010, %v1017
        %v1019 = vrot.slane %v1006, 4
        %v1020 = vsel %vm983, %v1019, %v994
        %v1021 = vrot.slane %v994, 4
        %v1022 = vsel %vm983, %v1006, %v1021
        %v1024 = vunpack.c.l.s4 1934713408
        %v1025 = vunpack.c.0.s8 %v1024
        %v1026 = vperm.slane %v1020, %v1025
        %v1028 = vunpack.c.l.s4 1934713408
        %v1029 = vunpack.c.0.s8 %v1028
        %v1030 = vperm.slane %v1022, %v1029
        %v1031 = vrot.slane %v1014, 4
        %v1032 = vsel %vm983, 0.0, %v1031
        %v1033 = vrot.slane %v1018, 4
        %v1034 = vsel %vm983, 0.0, %v1033
        %v1035 = vrot.slane %v1026, 4
        %v1036 = vsel %vm983, 0.0, %v1035
        %v1037 = vrot.slane %v1030, 4
        %v1038 = vsel %vm983, 0.0, %v1037
        %v1039 = vsel %vm983, %v1033, %v1014
        %v1041 = vunpack.c.l.s4 1983009808
        %v1042 = vunpack.c.0.s8 %v1041
        %v1043 = vperm.slane %v1039, %v1042
        %v1044 = vrot.slane %v1034, 4
        %v1045 = vsel %vm983, %v1044, %v1032
        %v1047 = vunpack.c.l.s4 1983009808
        %v1048 = vunpack.c.0.s8 %v1047
        %v1049 = vperm.slane %v1045, %v1048
        %v1050 = vsel %vm983, %v1037, %v1026
        %v1052 = vunpack.c.l.s4 1983009808
        %v1053 = vunpack.c.0.s8 %v1052
        %v1054 = vperm.slane %v1050, %v1053
        %v1055 = vrot.slane %v1038, 4
        %v1056 = vsel %vm983, %v1055, %v1036
        %v1058 = vunpack.c.l.s4 1983009808
        %v1059 = vunpack.c.0.s8 %v1058
        %v1060 = vperm.slane %v1056, %v1059
        %v1061 = vrot.slane %v1049, 4
        %v1062 = vsel %vm983, %v1061, %v1043
        %v1063 = vrot.slane %v1043, 4
        %v1064 = vsel %vm983, %v1049, %v1063
        %v1066 = vunpack.c.l.s4 1934713408
        %v1067 = vunpack.c.0.s8 %v1066
        %v1068 = vperm.slane %v1062, %v1067
        %v1070 = vunpack.c.l.s4 1934713408
        %v1071 = vunpack.c.0.s8 %v1070
        %v1072 = vperm.slane %v1064, %v1071
        %v1073 = vrot.slane %v1060, 4
        %v1074 = vsel %vm983, %v1073, %v1054
        %v1075 = vrot.slane %v1054, 4
        %v1076 = vsel %vm983, %v1060, %v1075
        %v1078 = vunpack.c.l.s4 1934713408
        %v1079 = vunpack.c.0.s8 %v1078
        %v1080 = vperm.slane %v1074, %v1079
        %v1082 = vunpack.c.l.s4 1934713408
        %v1083 = vunpack.c.0.s8 %v1082
        %v1084 = vperm.slane %v1076, %v1083
        %v1085 = vrot.slane %v1080, 4
        %v1086 = vsel %vm983, %v1085, %v1068
        %v1087 = vrot.slane %v1068, 4
        %v1088 = vsel %vm983, %v1080, %v1087
        %v1089 = vrot.slane %v1084, 4
        %v1090 = vsel %vm983, %v1089, %v1072
        %v1091 = vrot.slane %v1072, 4
        %v1092 = vsel %vm983, %v1084, %v1091
        %v1093 = vld [vmem:[#allocation2] sm:$0xff]
        %v1094 = vld [vmem:[#allocation2 + $0x8] sm:$0xff]
        %v1095 = vld [vmem:[#allocation2 + $0x10] sm:$0xff]
        %v1096 = vld [vmem:[#allocation2 + $0x18] sm:$0xff]
        %v1097 = vld [vmem:[#allocation2 + $0x20] sm:$0xff]
        %v1098 = vld [vmem:[#allocation2 + $0x28] sm:$0xff]
        %v1099 = vld [vmem:[#allocation2 + $0x30] sm:$0xff]
        %v1100 = vld [vmem:[#allocation2 + $0x38] sm:$0xff]
        %v1101 = vld [vmem:[#allocation3] sm:$0xff]
        %v1102 = vld [vmem:[#allocation3 + $0x8] sm:$0xff]
        %v1103 = vld [vmem:[#allocation3 + $0x10] sm:$0xff]
        %v1104 = vld [vmem:[#allocation3 + $0x18] sm:$0xff]
        %v1105 = vld [vmem:[#allocation3 + $0x20] sm:$0xff]
        %v1106 = vld [vmem:[#allocation3 + $0x28] sm:$0xff]
        %v1107 = vld [vmem:[#allocation3 + $0x30] sm:$0xff]
        %v1108 = vld [vmem:[#allocation3 + $0x38] sm:$0xff]
        %vm1109 = vcmask 64512
        %v1111 = vsel %vm1109, %v1086, 0
        %v1114 = vsel %vm1109, %v1093, 0
        %v1117 = vsel %vm1109, %v1094, 0
        %1119 = vmatpush.xpose.msra.mxu0 0.0
        %1120 = vmatpush.xpose.msra.mxu0 0.0
        %1121 = vmatpush.xpose.msra.mxu0 0.0
        %1122 = vmatpush.xpose.msra.mxu0 0.0
        %1123 = vmatpush.xpose.msra.mxu0 0.0
        %1124 = vmatpush.xpose.msra.mxu0 0.0
        %1125 = vmatpush.xpose.msra.mxu0 0.0
        %1126 = vmatpush.xpose.msra.mxu0 0.0
        %1127 = vmatpush.xpose.msra.mxu0 0.0
        %1128 = vmatpush.xpose.msra.mxu0 0.0
        %1129 = vmatpush.xpose.msra.mxu0 0.0
        %1130 = vmatpush.xpose.msra.mxu0 0.0
        %1131 = vmatpush.xpose.msra.mxu0 0.0
        %1132 = vmatpush.xpose.msra.mxu0 0.0
        %1133 = vmatpush.xpose.msra.mxu0 %v1117
        %1134 = vmatpush.xpose.msra.mxu0 %v1114
        %1135 = vmatmul.f32.gmra.mxu0 %v1111
        %v1136 = vpop.f32.mrf.mxu0
        %v1137 = vadd.f32 0.0, %v1136
        %1138 = vdwg.mxu0
        %v1140 = vsel %vm1109, %v1088, 0
        %v1143 = vsel %vm1109, %v1095, 0
        %v1146 = vsel %vm1109, %v1096, 0
        %1148 = vmatpush.xpose.msra.mxu0 0.0
        %1149 = vmatpush.xpose.msra.mxu0 0.0
        %1150 = vmatpush.xpose.msra.mxu0 0.0
        %1151 = vmatpush.xpose.msra.mxu0 0.0
        %1152 = vmatpush.xpose.msra.mxu0 0.0
        %1153 = vmatpush.xpose.msra.mxu0 0.0
        %1154 = vmatpush.xpose.msra.mxu0 0.0
        %1155 = vmatpush.xpose.msra.mxu0 0.0
        %1156 = vmatpush.xpose.msra.mxu0 0.0
        %1157 = vmatpush.xpose.msra.mxu0 0.0
        %1158 = vmatpush.xpose.msra.mxu0 0.0
        %1159 = vmatpush.xpose.msra.mxu0 0.0
        %1160 = vmatpush.xpose.msra.mxu0 0.0
        %1161 = vmatpush.xpose.msra.mxu0 0.0
        %1162 = vmatpush.xpose.msra.mxu0 %v1146
        %1163 = vmatpush.xpose.msra.mxu0 %v1143
        %1164 = vmatmul.f32.gmra.mxu0 %v1140
        %v1165 = vpop.f32.mrf.mxu0
        %v1166 = vadd.f32 0.0, %v1165
        %1167 = vdwg.mxu0
        %v1169 = vsel %vm1109, %v1090, 0
        %v1172 = vsel %vm1109, %v1097, 0
        %v1175 = vsel %vm1109, %v1098, 0
        %1177 = vmatpush.xpose.msra.mxu0 0.0
        %1178 = vmatpush.xpose.msra.mxu0 0.0
        %1179 = vmatpush.xpose.msra.mxu0 0.0
        %1180 = vmatpush.xpose.msra.mxu0 0.0
        %1181 = vmatpush.xpose.msra.mxu0 0.0
        %1182 = vmatpush.xpose.msra.mxu0 0.0
        %1183 = vmatpush.xpose.msra.mxu0 0.0
        %1184 = vmatpush.xpose.msra.mxu0 0.0
        %1185 = vmatpush.xpose.msra.mxu0 0.0
        %1186 = vmatpush.xpose.msra.mxu0 0.0
        %1187 = vmatpush.xpose.msra.mxu0 0.0
        %1188 = vmatpush.xpose.msra.mxu0 0.0
        %1189 = vmatpush.xpose.msra.mxu0 0.0
        %1190 = vmatpush.xpose.msra.mxu0 0.0
        %1191 = vmatpush.xpose.msra.mxu0 %v1175
        %1192 = vmatpush.xpose.msra.mxu0 %v1172
        %1193 = vmatmul.f32.gmra.mxu0 %v1169
        %v1194 = vpop.f32.mrf.mxu0
        %v1195 = vadd.f32 0.0, %v1194
        %1196 = vdwg.mxu0
        %v1198 = vsel %vm1109, %v1092, 0
        %v1201 = vsel %vm1109, %v1099, 0
        %v1204 = vsel %vm1109, %v1100, 0
        %1206 = vmatpush.xpose.msra.mxu0 0.0
        %1207 = vmatpush.xpose.msra.mxu0 0.0
        %1208 = vmatpush.xpose.msra.mxu0 0.0
        %1209 = vmatpush.xpose.msra.mxu0 0.0
        %1210 = vmatpush.xpose.msra.mxu0 0.0
        %1211 = vmatpush.xpose.msra.mxu0 0.0
        %1212 = vmatpush.xpose.msra.mxu0 0.0
        %1213 = vmatpush.xpose.msra.mxu0 0.0
        %1214 = vmatpush.xpose.msra.mxu0 0.0
        %1215 = vmatpush.xpose.msra.mxu0 0.0
        %1216 = vmatpush.xpose.msra.mxu0 0.0
        %1217 = vmatpush.xpose.msra.mxu0 0.0
        %1218 = vmatpush.xpose.msra.mxu0 0.0
        %1219 = vmatpush.xpose.msra.mxu0 0.0
        %1220 = vmatpush.xpose.msra.mxu0 %v1204
        %1221 = vmatpush.xpose.msra.mxu0 %v1201
        %1222 = vmatmul.f32.gmra.mxu0 %v1198
        %v1223 = vpop.f32.mrf.mxu0
        %v1224 = vadd.f32 0.0, %v1223
        %1225 = vdwg.mxu0
        %vm1226 = vcmask 130048
        %v1227 = vsel %vm1226, %v1137, -inf
        %1228 = vmax.xlane.f32.xlu0 %v1227
        %v1229 = vpop.xlane.xlu0 %1228
        %v1230 = vsel %vm1226, %v1166, -inf
        %1231 = vmax.xlane.f32.xlu0 %v1230
        %v1232 = vpop.xlane.xlu0 %1231
        %v1233 = vsel %vm1226, %v1195, -inf
        %1234 = vmax.xlane.f32.xlu0 %v1233
        %v1235 = vpop.xlane.xlu0 %1234
        %v1236 = vsel %vm1226, %v1224, -inf
        %1237 = vmax.xlane.f32.xlu0 %v1236
        %v1238 = vpop.xlane.xlu0 %1237
        %v1239 = vsub.f32 -inf, %v1229
        %v1240 = vsub.f32 -inf, %v1232
        %v1241 = vsub.f32 -inf, %v1235
        %v1242 = vsub.f32 -inf, %v1238
        %v1243 = vmul.f32 %v1239, 1.442695
        %v1244 = vpow.pop %v1243
        %v1245 = vmul.f32 %v1240, 1.442695
        %v1246 = vpow.pop %v1245
        %v1247 = vmul.f32 %v1241, 1.442695
        %v1248 = vpow.pop %v1247
        %v1249 = vmul.f32 %v1242, 1.442695
        %v1250 = vpow.pop %v1249
        %v1251 = vsub.f32 %v1137, %v1229
        %v1252 = vsub.f32 %v1166, %v1232
        %v1253 = vsub.f32 %v1195, %v1235
        %v1254 = vsub.f32 %v1224, %v1238
        %v1255 = vmul.f32 %v1251, 1.442695
        %v1256 = vpow.pop %v1255
        %v1257 = vmul.f32 %v1252, 1.442695
        %v1258 = vpow.pop %v1257
        %v1259 = vmul.f32 %v1253, 1.442695
        %v1260 = vpow.pop %v1259
        %v1261 = vmul.f32 %v1254, 1.442695
        %v1262 = vpow.pop %v1261
        %v1263 = vmul.f32 %v1244, 0.0
        %v1264 = vmul.f32 %v1246, 0.0
        %v1265 = vmul.f32 %v1248, 0.0
        %v1266 = vmul.f32 %v1250, 0.0
        %v1267 = vsel %vm1226, %v1256, 0.0
        %1268 = vadd.xlane.f32.xlu0 %v1267
        %v1269 = vpop.xlane.xlu0 %1268
        %v1270 = vsel %vm1226, %v1258, 0.0
        %1271 = vadd.xlane.f32.xlu0 %v1270
        %v1272 = vpop.xlane.xlu0 %1271
        %v1273 = vsel %vm1226, %v1260, 0.0
        %1274 = vadd.xlane.f32.xlu0 %v1273
        %v1275 = vpop.xlane.xlu0 %1274
        %v1276 = vsel %vm1226, %v1262, 0.0
        %1277 = vadd.xlane.f32.xlu0 %v1276
        %v1278 = vpop.xlane.xlu0 %1277
        %v1279 = vadd.f32 %v1263, %v1269
        %v1280 = vadd.f32 %v1264, %v1272
        %v1281 = vadd.f32 %v1265, %v1275
        %v1282 = vadd.f32 %v1266, %v1278
        %v1284 = vsel %vm1226, %v1256, 0
        %1286 = vmatpush.msra.mxu0 0.0
        %1287 = vmatpush.msra.mxu0 0.0
        %1288 = vmatpush.msra.mxu0 0.0
        %1289 = vmatpush.msra.mxu0 0.0
        %1290 = vmatpush.msra.mxu0 0.0
        %1291 = vmatpush.msra.mxu0 0.0
        %1292 = vmatpush.msra.mxu0 0.0
        %1293 = vmatpush.msra.mxu0 0.0
        %1294 = vmatpush.msra.mxu0 0.0
        %1295 = vmatpush.msra.mxu0 0.0
        %1296 = vmatpush.msra.mxu0 0.0
        %1297 = vmatpush.msra.mxu0 0.0
        %1298 = vmatpush.msra.mxu0 0.0
        %1299 = vmatpush.msra.mxu0 0.0
        %1300 = vmatpush.msra.mxu0 %v1102
        %1301 = vmatpush.msra.mxu0 %v1101
        %1302 = vmatmul.f32.gmra.mxu0 %v1284
        %v1303 = vpop.f32.mrf.mxu0
        %v1304 = vadd.f32 0.0, %v1303
        %1305 = vdwg.mxu0
        %v1307 = vsel %vm1226, %v1258, 0
        %1309 = vmatpush.msra.mxu0 0.0
        %1310 = vmatpush.msra.mxu0 0.0
        %1311 = vmatpush.msra.mxu0 0.0
        %1312 = vmatpush.msra.mxu0 0.0
        %1313 = vmatpush.msra.mxu0 0.0
        %1314 = vmatpush.msra.mxu0 0.0
        %1315 = vmatpush.msra.mxu0 0.0
        %1316 = vmatpush.msra.mxu0 0.0
        %1317 = vmatpush.msra.mxu0 0.0
        %1318 = vmatpush.msra.mxu0 0.0
        %1319 = vmatpush.msra.mxu0 0.0
        %1320 = vmatpush.msra.mxu0 0.0
        %1321 = vmatpush.msra.mxu0 0.0
        %1322 = vmatpush.msra.mxu0 0.0
        %1323 = vmatpush.msra.mxu0 %v1104
        %1324 = vmatpush.msra.mxu0 %v1103
        %1325 = vmatmul.f32.gmra.mxu0 %v1307
        %v1326 = vpop.f32.mrf.mxu0
        %v1327 = vadd.f32 0.0, %v1326
        %1328 = vdwg.mxu0
        %v1330 = vsel %vm1226, %v1260, 0
        %1332 = vmatpush.msra.mxu0 0.0
        %1333 = vmatpush.msra.mxu0 0.0
        %1334 = vmatpush.msra.mxu0 0.0
        %1335 = vmatpush.msra.mxu0 0.0
        %1336 = vmatpush.msra.mxu0 0.0
        %1337 = vmatpush.msra.mxu0 0.0
        %1338 = vmatpush.msra.mxu0 0.0
        %1339 = vmatpush.msra.mxu0 0.0
        %1340 = vmatpush.msra.mxu0 0.0
        %1341 = vmatpush.msra.mxu0 0.0
        %1342 = vmatpush.msra.mxu0 0.0
        %1343 = vmatpush.msra.mxu0 0.0
        %1344 = vmatpush.msra.mxu0 0.0
        %1345 = vmatpush.msra.mxu0 0.0
        %1346 = vmatpush.msra.mxu0 %v1106
        %1347 = vmatpush.msra.mxu0 %v1105
        %1348 = vmatmul.f32.gmra.mxu0 %v1330
        %v1349 = vpop.f32.mrf.mxu0
        %v1350 = vadd.f32 0.0, %v1349
        %1351 = vdwg.mxu0
        %v1353 = vsel %vm1226, %v1262, 0
        %1355 = vmatpush.msra.mxu0 0.0
        %1356 = vmatpush.msra.mxu0 0.0
        %1357 = vmatpush.msra.mxu0 0.0
        %1358 = vmatpush.msra.mxu0 0.0
        %1359 = vmatpush.msra.mxu0 0.0
        %1360 = vmatpush.msra.mxu0 0.0
        %1361 = vmatpush.msra.mxu0 0.0
        %1362 = vmatpush.msra.mxu0 0.0
        %1363 = vmatpush.msra.mxu0 0.0
        %1364 = vmatpush.msra.mxu0 0.0
        %1365 = vmatpush.msra.mxu0 0.0
        %1366 = vmatpush.msra.mxu0 0.0
        %1367 = vmatpush.msra.mxu0 0.0
        %1368 = vmatpush.msra.mxu0 0.0
        %1369 = vmatpush.msra.mxu0 %v1108
        %1370 = vmatpush.msra.mxu0 %v1107
        %1371 = vmatmul.f32.gmra.mxu0 %v1353
        %v1372 = vpop.f32.mrf.mxu0
        %v1373 = vadd.f32 0.0, %v1372
        %1374 = vdwg.mxu0
        %v1375 = vadd.f32 %v1263, %v1304
        %v1376 = vadd.f32 %v1264, %v1327
        %v1377 = vadd.f32 %v1265, %v1350
        %v1378 = vadd.f32 %v1266, %v1373
        %v1379 = vrcp.pop %v1279
        %v1380 = vmul.f32 %v1279, %v1379
        %v1381 = vsub.f32 1.0, %v1380
        %v1382 = vmul.f32 %v1379, %v1381
        %v1383 = vadd.f32 %v1379, %v1382
        %vm1384 = vweird.f32 %v1279
        %vm1385 = vweird.f32 %v1379
        %vm1386 = vmor %vm1384, %vm1385
        %v1387 = vsel %vm1386, %v1379, %v1383
        %v1388 = vand.u32 2147483647, %v1279
        %vm1389 = vcmp.eq.f32.partialorder %v1388, 8.507059e+37
        %v1390 = vand.u32 %v1279, 2147483648
        %v1391 = vor.u32 1.1754944e-38, %v1390
        %v1392 = vsel %vm1389, %v1391, %v1387
        %v1393 = vmul.f32 %v1375, %v1392
        %v1394 = vrcp.pop %v1280
        %v1395 = vmul.f32 %v1280, %v1394
        %v1396 = vsub.f32 1.0, %v1395
        %v1397 = vmul.f32 %v1394, %v1396
        %v1398 = vadd.f32 %v1394, %v1397
        %vm1399 = vweird.f32 %v1280
        %vm1400 = vweird.f32 %v1394
        %vm1401 = vmor %vm1399, %vm1400
        %v1402 = vsel %vm1401, %v1394, %v1398
        %v1403 = vand.u32 2147483647, %v1280
        %vm1404 = vcmp.eq.f32.partialorder %v1403, 8.507059e+37
        %v1405 = vand.u32 %v1280, 2147483648
        %v1406 = vor.u32 1.1754944e-38, %v1405
        %v1407 = vsel %vm1404, %v1406, %v1402
        %v1408 = vmul.f32 %v1376, %v1407
        %v1409 = vrcp.pop %v1281
        %v1410 = vmul.f32 %v1281, %v1409
        %v1411 = vsub.f32 1.0, %v1410
        %v1412 = vmul.f32 %v1409, %v1411
        %v1413 = vadd.f32 %v1409, %v1412
        %vm1414 = vweird.f32 %v1281
        %vm1415 = vweird.f32 %v1409
        %vm1416 = vmor %vm1414, %vm1415
        %v1417 = vsel %vm1416, %v1409, %v1413
        %v1418 = vand.u32 2147483647, %v1281
        %vm1419 = vcmp.eq.f32.partialorder %v1418, 8.507059e+37
        %v1420 = vand.u32 %v1281, 2147483648
        %v1421 = vor.u32 1.1754944e-38, %v1420
        %v1422 = vsel %vm1419, %v1421, %v1417
        %v1423 = vmul.f32 %v1377, %v1422
        %v1424 = vrcp.pop %v1282
        %v1425 = vmul.f32 %v1282, %v1424
        %v1426 = vsub.f32 1.0, %v1425
        %v1427 = vmul.f32 %v1424, %v1426
        %v1428 = vadd.f32 %v1424, %v1427
        %vm1429 = vweird.f32 %v1282
        %vm1430 = vweird.f32 %v1424
        %vm1431 = vmor %vm1429, %vm1430
        %v1432 = vsel %vm1431, %v1424, %v1428
        %v1433 = vand.u32 2147483647, %v1282
        %vm1434 = vcmp.eq.f32.partialorder %v1433, 8.507059e+37
        %v1435 = vand.u32 %v1282, 2147483648
        %v1436 = vor.u32 1.1754944e-38, %v1435
        %v1437 = vsel %vm1434, %v1436, %v1432
        %v1438 = vmul.f32 %v1378, %v1437
        %v1439 = vrot.slane %v1423, 4
        %v1440 = vsel %vm983, %v1439, %v1393
        %v1441 = vrot.slane %v1393, 4
        %v1442 = vsel %vm983, %v1423, %v1441
        %v1444 = vunpack.c.l.s4 1983009808
        %v1445 = vunpack.c.0.s8 %v1444
        %v1446 = vperm.slane %v1440, %v1445
        %v1448 = vunpack.c.l.s4 1983009808
        %v1449 = vunpack.c.0.s8 %v1448
        %v1450 = vperm.slane %v1442, %v1449
        %v1451 = vrot.slane %v1438, 4
        %v1452 = vsel %vm983, %v1451, %v1408
        %v1453 = vrot.slane %v1408, 4
        %v1454 = vsel %vm983, %v1438, %v1453
        %v1456 = vunpack.c.l.s4 1983009808
        %v1457 = vunpack.c.0.s8 %v1456
        %v1458 = vperm.slane %v1452, %v1457
        %v1460 = vunpack.c.l.s4 1983009808
        %v1461 = vunpack.c.0.s8 %v1460
        %v1462 = vperm.slane %v1454, %v1461
        %v1463 = vrot.slane %v1458, 4
        %v1464 = vsel %vm983, %v1463, %v1446
        %v1465 = vrot.slane %v1446, 4
        %v1466 = vsel %vm983, %v1458, %v1465
        %v1468 = vunpack.c.l.s4 1934713408
        %v1469 = vunpack.c.0.s8 %v1468
        %v1470 = vperm.slane %v1464, %v1469
        %v1472 = vunpack.c.l.s4 1934713408
        %v1473 = vunpack.c.0.s8 %v1472
        %v1474 = vperm.slane %v1466, %v1473
        %v1475 = vrot.slane %v1462, 4
        %v1476 = vsel %vm983, %v1475, %v1450
        %v1477 = vrot.slane %v1450, 4
        %v1478 = vsel %vm983, %v1462, %v1477
        %v1480 = vunpack.c.l.s4 1934713408
        %v1481 = vunpack.c.0.s8 %v1480
        %v1482 = vperm.slane %v1476, %v1481
        %v1484 = vunpack.c.l.s4 1934713408
        %v1485 = vunpack.c.0.s8 %v1484
        %v1486 = vperm.slane %v1478, %v1485
        %v1487 = vrot.slane %v1470, 4
        %v1488 = vsel %vm983, 0.0, %v1487
        %v1489 = vrot.slane %v1474, 4
        %v1490 = vsel %vm983, 0.0, %v1489
        %v1491 = vrot.slane %v1482, 4
        %v1492 = vsel %vm983, 0.0, %v1491
        %v1493 = vrot.slane %v1486, 4
        %v1494 = vsel %vm983, 0.0, %v1493
        %v1495 = vsel %vm983, %v1489, %v1470
        %v1497 = vunpack.c.l.s4 1983009808
        %v1498 = vunpack.c.0.s8 %v1497
        %v1499 = vperm.slane %v1495, %v1498
        %v1500 = vrot.slane %v1490, 4
        %v1501 = vsel %vm983, %v1500, %v1488
        %v1503 = vunpack.c.l.s4 1983009808
        %v1504 = vunpack.c.0.s8 %v1503
        %v1505 = vperm.slane %v1501, %v1504
        %v1506 = vsel %vm983, %v1493, %v1482
        %v1508 = vunpack.c.l.s4 1983009808
        %v1509 = vunpack.c.0.s8 %v1508
        %v1510 = vperm.slane %v1506, %v1509
        %v1511 = vrot.slane %v1494, 4
        %v1512 = vsel %vm983, %v1511, %v1492
        %v1514 = vunpack.c.l.s4 1983009808
        %v1515 = vunpack.c.0.s8 %v1514
        %v1516 = vperm.slane %v1512, %v1515
        %v1517 = vrot.slane %v1505, 4
        %v1518 = vsel %vm983, %v1517, %v1499
        %v1519 = vrot.slane %v1499, 4
        %v1520 = vsel %vm983, %v1505, %v1519
        %v1522 = vunpack.c.l.s4 1934713408
        %v1523 = vunpack.c.0.s8 %v1522
        %v1524 = vperm.slane %v1518, %v1523
        %v1526 = vunpack.c.l.s4 1934713408
        %v1527 = vunpack.c.0.s8 %v1526
        %v1528 = vperm.slane %v1520, %v1527
        %v1529 = vrot.slane %v1516, 4
        %v1530 = vsel %vm983, %v1529, %v1510
        %v1531 = vrot.slane %v1510, 4
        %v1532 = vsel %vm983, %v1516, %v1531
        %v1534 = vunpack.c.l.s4 1934713408
        %v1535 = vunpack.c.0.s8 %v1534
        %v1536 = vperm.slane %v1530, %v1535
        %v1538 = vunpack.c.l.s4 1934713408
        %v1539 = vunpack.c.0.s8 %v1538
        %v1540 = vperm.slane %v1532, %v1539
        %v1541 = vrot.slane %v1536, 4
        %v1542 = vsel %vm983, %v1541, %v1524
        %v1543 = vrot.slane %v1524, 4
        %v1544 = vsel %vm983, %v1536, %v1543
        %v1545 = vrot.slane %v1540, 4
        %v1546 = vsel %vm983, %v1545, %v1528
        %v1547 = vrot.slane %v1528, 4
        %v1548 = vsel %vm983, %v1540, %v1547
        %1550 = vrot.lane.b32.xlu0 %v1544, 8
        %v1551 = vpop.permute.xlu0 %1550
        %1554 = vrot.lane.b32.xlu0 %v1546, 16
        %v1555 = vpop.permute.xlu0 %1554
        %1558 = vrot.lane.b32.xlu0 %v1548, 24
        %v1559 = vpop.permute.xlu0 %1558
        %v1561 = vsel %vm1109, %v1542, %v1551
        %v1562 = vsel %vm1226, %v1561, %v1555
        %vm1563 = vcmask 195584
        %v1564 = vsel %vm1563, %v1562, %v1559
        %v1565 = vld [vmem:[#allocation7] sm:$0xff]
        %v1566 = vld [vmem:[#allocation7 + $0x8] sm:$0xff]
        %v1567 = vld [vmem:[#allocation7 + $0x10] sm:$0xff]
        %v1568 = vld [vmem:[#allocation7 + $0x18] sm:$0xff]
        %v1569 = vld [vmem:[%s8] sm:$0x1]
        %v1571 = vperm.slane %v1569, 0
        %v1574 = vsel %vm947, %v1564, 0
        %1576 = vmatpush.msra.mxu0 0.0
        %1577 = vmatpush.msra.mxu0 0.0
        %1578 = vmatpush.msra.mxu0 0.0
        %1579 = vmatpush.msra.mxu0 0.0
        %1580 = vmatpush.msra.mxu0 0.0
        %1581 = vmatpush.msra.mxu0 0.0
        %1582 = vmatpush.msra.mxu0 0.0
        %1583 = vmatpush.msra.mxu0 0.0
        %1584 = vmatpush.msra.mxu0 0.0
        %1585 = vmatpush.msra.mxu0 0.0
        %1586 = vmatpush.msra.mxu0 0.0
        %1587 = vmatpush.msra.mxu0 0.0
        %1588 = vmatpush.msra.mxu0 %v1568
        %1589 = vmatpush.msra.mxu0 %v1567
        %1590 = vmatpush.msra.mxu0 %v1566
        %1591 = vmatpush.msra.mxu0 %v1565
        %1592 = vmatmul.f32.gmra.mxu0 %v1574
        %v1593 = vpop.f32.mrf.mxu0
        %v1594 = vadd.f32 %v1571, %v1593
        %1595 = vdwg.mxu0
        %v1596 = vadd.f32 %v938, %v1594
        %v1597 = vsel %vm947, %v1596, 0.0
        %1598 = vadd.xlane.f32.xlu0 %v1597
        %v1599 = vpop.xlane.xlu0 %1598
        %v1600 = vrcp.pop 32.0
        %v1601 = vmul.f32 32.0, %v1600
        %v1602 = vsub.f32 1.0, %v1601
        %v1603 = vmul.f32 %v1600, %v1602
        %v1604 = vadd.f32 %v1600, %v1603
        %vm1605 = vweird.f32 %v1600
        %v1606 = vsel %vm1605, %v1600, %v1604
        %v1607 = vmul.f32 %v1599, %v1606
        %v1608 = vsub.f32 %v1596, %v1607
        %v1609 = vmul.f32 %v1608, %v1608
        %v1610 = vsel %vm947, %v1609, 0.0
        %1611 = vadd.xlane.f32.xlu0 %v1610
        %v1612 = vpop.xlane.xlu0 %1611
        %v1613 = vmul.f32 %v1612, %v1606
        %v1614 = vadd.f32 %v1613, 1e-05
        %v1615 = vrsqrt.pop %v1614
        %v1616 = vmul.f32 %v1615, %v1614
        %v1617 = vmul.f32 %v1616, %v1615
        %v1618 = vmul.f32 0.5, %v1617
        %v1619 = vsub.f32 1.5, %v1618
        %v1620 = vmul.f32 %v1615, %v1619
        %vm1621 = vweird.f32 %v1614
        %vm1622 = vweird.f32 %v1615
        %vm1623 = vmor %vm1621, %vm1622
        %v1624 = vsel %vm1623, %v1615, %v1620
        %v1625 = vmul.f32 %v1608, %v1624
        %v1626 = vld [vmem:[%s9] sm:$0x1]
        %v1628 = vperm.slane %v1626, 0
        %v1630 = vmul.f32 %v1625, %v1628
        %v1631 = vld [vmem:[%s10] sm:$0x1]
        %v1633 = vperm.slane %v1631, 0
        %v1635 = vadd.f32 %v1630, %v1633
        %v1636 = vld [vmem:[#allocation9] sm:$0xff]
        %v1637 = vld [vmem:[#allocation9 + $0x8] sm:$0xff]
        %v1638 = vld [vmem:[#allocation9 + $0x10] sm:$0xff]
        %v1639 = vld [vmem:[#allocation9 + $0x18] sm:$0xff]
        %v1640 = vld [vmem:[%s12] sm:$0x1]
        %v1642 = vperm.slane %v1640, 0
        %v1645 = vsel %vm947, %v1635, 0
        %1647 = vmatpush.msra.mxu0 0.0
        %1648 = vmatpush.msra.mxu0 0.0
        %1649 = vmatpush.msra.mxu0 0.0
        %1650 = vmatpush.msra.mxu0 0.0
        %1651 = vmatpush.msra.mxu0 0.0
        %1652 = vmatpush.msra.mxu0 0.0
        %1653 = vmatpush.msra.mxu0 0.0
        %1654 = vmatpush.msra.mxu0 0.0
        %1655 = vmatpush.msra.mxu0 0.0
        %1656 = vmatpush.msra.mxu0 0.0
        %1657 = vmatpush.msra.mxu0 0.0
        %1658 = vmatpush.msra.mxu0 0.0
        %1659 = vmatpush.msra.mxu0 %v1639
        %1660 = vmatpush.msra.mxu0 %v1638
        %1661 = vmatpush.msra.mxu0 %v1637
        %1662 = vmatpush.msra.mxu0 %v1636
        %1663 = vmatmul.f32.gmra.mxu0 %v1645
        %v1664 = vpop.f32.mrf.mxu0
        %v1665 = vadd.f32 %v1642, %v1664
        %1666 = vdwg.mxu0
        %v1667 = vmax.f32 %v1665, 0.0
        %v1668 = vld [vmem:[%s13] sm:$0xff]
        %v1669 = vld [vmem:[%s13 + $0x8] sm:$0xff]
        %v1670 = vld [vmem:[%s13 + $0x10] sm:$0xff]
        %v1671 = vld [vmem:[%s13 + $0x18] sm:$0xff]
        %v1672 = vld [vmem:[%s13 + $0x20] sm:$0xff]
        %v1673 = vld [vmem:[%s13 + $0x28] sm:$0xff]
        %v1674 = vld [vmem:[%s13 + $0x30] sm:$0xff]
        %v1675 = vld [vmem:[%s13 + $0x38] sm:$0xff]
        %v1676 = vld [vmem:[%s14] sm:$0x1]
        %v1678 = vperm.slane %v1676, 0
        %vm1680 = vcmask 523264
        %v1682 = vsel %vm1680, %v1667, 0
        %1684 = vmatpush.msra.mxu0 0.0
        %1685 = vmatpush.msra.mxu0 0.0
        %1686 = vmatpush.msra.mxu0 0.0
        %1687 = vmatpush.msra.mxu0 0.0
        %1688 = vmatpush.msra.mxu0 0.0
        %1689 = vmatpush.msra.mxu0 0.0
        %1690 = vmatpush.msra.mxu0 0.0
        %1691 = vmatpush.msra.mxu0 0.0
        %1692 = vmatpush.msra.mxu0 %v1675
        %1693 = vmatpush.msra.mxu0 %v1674
        %1694 = vmatpush.msra.mxu0 %v1673
        %1695 = vmatpush.msra.mxu0 %v1672
        %1696 = vmatpush.msra.mxu0 %v1671
        %1697 = vmatpush.msra.mxu0 %v1670
        %1698 = vmatpush.msra.mxu0 %v1669
        %1699 = vmatpush.msra.mxu0 %v1668
        %1700 = vmatmul.f32.gmra.mxu0 %v1682
        %v1701 = vpop.f32.mrf.mxu0
        %v1702 = vadd.f32 %v1678, %v1701
        %1703 = vdwg.mxu0
        %v1704 = vadd.f32 %v1635, %v1702
        %v1705 = vsel %vm947, %v1704, 0.0
        %1706 = vadd.xlane.f32.xlu0 %v1705
        %v1707 = vpop.xlane.xlu0 %1706
        %v1708 = vmul.f32 %v1707, %v1606
        %v1709 = vsub.f32 %v1704, %v1708
        %v1710 = vmul.f32 %v1709, %v1709
        %v1711 = vsel %vm947, %v1710, 0.0
        %1712 = vadd.xlane.f32.xlu0 %v1711
        %v1713 = vpop.xlane.xlu0 %1712
        %v1714 = vmul.f32 %v1713, %v1606
        %v1715 = vadd.f32 %v1714, 1e-05
        %v1716 = vrsqrt.pop %v1715
        %v1717 = vmul.f32 %v1716, %v1715
        %v1718 = vmul.f32 %v1717, %v1716
        %v1719 = vmul.f32 0.5, %v1718
        %v1720 = vsub.f32 1.5, %v1719
        %v1721 = vmul.f32 %v1716, %v1720
        %vm1722 = vweird.f32 %v1715
        %vm1723 = vweird.f32 %v1716
        %vm1724 = vmor %vm1722, %vm1723
        %v1725 = vsel %vm1724, %v1716, %v1721
        %v1726 = vmul.f32 %v1709, %v1725
        %v1727 = vld [vmem:[%s15] sm:$0x1]
        %v1729 = vperm.slane %v1727, 0
        %v1731 = vmul.f32 %v1726, %v1729
        %v1732 = vld [vmem:[%s16] sm:$0x1]
        %v1734 = vperm.slane %v1732, 0
        %v1736 = vadd.f32 %v1731, %v1734
        %1737 = vst.msk [vmem:[%s605] sm:$0xff] %vm947, %v1736
        %s1738 = sand.u32 %s417, 1
        %s1739 = scalar_lea.sflag [#allocation6], %s1738
        %s1740 = sand.u32 %s417, 1
        %s1741 = smul.addr %s1740, 8
        %s1742 = scalar_lea.vmem [#allocation10], %s1741
        // Predicated region
        $region112: #{tpu_custom_call.1} parent=87 // pred_check
          %p1743 = pneg %p427
        $region113: #{tpu_custom_call.1} parent=87 // pred_check_branch
          %1745 = sbr.rel (%p1743) target = $region115
        $region114: #{tpu_custom_call.1} parent=87 // pred_region
          %1747 = vsyncadd %s1739, 0
          %s1748 = smul.addr %s37, 2
          %s1749 = sadd.s32 %s38, %s1748
          %s1750 = smul.addr %s1749, 8
          %s1751 = scalar_lea.hbm %s17, %s1750
          %s1753 = sshll.u32 %s1742, 4
          %s1754 = int_to_ptr.vmem [resolvable:$true] %s1753
          %s1755 = sshll.u32 %s1751, 4
          %s1756 = int_to_ptr.hbm [resolvable:$true] %s1755
          %1758 = dma.vmem_to_hbm [thread:$0]  %s1754, 128, %s1756, %s1739
        $region115: #{tpu_custom_call.1} parent=87 // pred_fallthru
          _
      $region88: #{tpu_custom_call.1} parent=5 // pred_fallthru
        _
      %p1759 = scmp.le.s32.totalorder 2, %s28
      // Predicated region
      $region116: #{tpu_custom_call.1} parent=5 // pred_check
        %p1760 = pneg %p1759
      $region117: #{tpu_custom_call.1} parent=5 // pred_check_branch
        %1762 = sbr.rel (%p1760) target = $region119
      $region118: #{tpu_custom_call.1} parent=5 // pred_region
        %s1763 = ssub.s32 %s28, 2
        // Predicated region
        $region120: #{tpu_custom_call.1} parent=118 // pred_check
          %p1764 = pneg %p433
        $region121: #{tpu_custom_call.1} parent=118 // pred_check_branch
          %1766 = sbr.rel (%p1764) target = $region123
        $region122: #{tpu_custom_call.1} parent=118 // pred_region
          %s1767 = sand.u32 %s418, 1
          %s1768 = scalar_lea.sflag [#allocation6], %s1767
          %s1769 = sand.u32 %s418, 1
          %s1770 = smul.addr %s1769, 8
          %s1771 = scalar_lea.vmem [#allocation10], %s1770
          %1773 = dma.done %s1768, 128
        $region123: #{tpu_custom_call.1} parent=118 // pred_fallthru
          _
      $region119: #{tpu_custom_call.1} parent=5 // pred_fallthru
        _
    $region6: #{tpu_custom_call.1} parent=1 // loop_footer
      %s32 = sadd.s32 1, %s28
    $region7: #{tpu_custom_call.1} parent=1 // loop_footer_branch
      %27 = sbr.rel target = $region3
    $region8: #{tpu_custom_call.1} parent=1 // loop_exit
      _
    %1774 = vsyncpa [#allocation5], 1
    %s1775 = scalar_lea.sflag [#allocation5], 1
    %1776 = vsyncpa %s1775, 1
    %1777 = vsyncpa [#allocation8], 1
    %1778 = vsyncpa [#allocation6], 1
    %s1779 = scalar_lea.sflag [#allocation6], 1
    %1780 = vsyncpa %s1779, 1

</llo_original>
